<compile_context>
chip_gen: v5e
topology: v5e:2x2
jax: 0.10.0
libtpu: 0.0.40
codegen_flags: <defaults>
</compile_context>

<pallas_src>
import functools

import jax
import jax.numpy as jnp
from jax.experimental import pallas as pl
from jax.experimental.pallas import tpu as pltpu


def _silu(y):
    return y * jax.nn.sigmoid(y)


# ----------------------------------------------------------------------------
# Fused kernel: one grid step == one image, layout (C, H*W), spatial on lanes
# ----------------------------------------------------------------------------

def _ca_kernel(x_ref, w1t_ref, s1_ref, b1_ref, w2t_ref, s2_ref, b2_ref,
               pool_ref, wat_ref, sa_ref, ba_ref, wht_ref, bh_ref,
               wwt_ref, bw_ref, eh_ref, ew_ref, out_ref,
               *, H, W, c1, c_, c2, mip, add, mxu_dtype):
    f32 = jnp.float32
    S = H * W

    x = x_ref[...].reshape(c1, S).astype(f32)          # (c1, S), NCHW-native
    x_mxu = x.astype(mxu_dtype)

    # ---- cv1: 1x1 conv (no bias) + folded BN + SiLU  (one MXU GEMM, K=c1) ----
    y1 = jnp.dot(w1t_ref[...], x_mxu, preferred_element_type=f32)
    y1 = _silu(y1 * s1_ref[...] + b1_ref[...])          # (c_, S) f32

    # ---- cv2: 3x3 'same' conv (g=1, no bias) + folded BN + SiLU as ONE im2col GEMM ----
    # A (dy,dx) tap of the 3x3 window is a flat lane shift of dy*W+dx in row-major (C, H*W).
    # Vertical out-of-range is absorbed by (W+1)-wide zero pads on both ends; horizontal
    # out-of-range (row wrap-around) is killed by masking output columns w==0 / w==W-1.
    zpad = jnp.zeros((c_, W + 1), f32)
    y1pad = jnp.concatenate([zpad, y1, zpad], axis=1)   # (c_, S + 2W + 2)

    wcol = jax.lax.broadcasted_iota(jnp.int32, (1, S), 1) % W
    mask_l = (wcol >= 1).astype(f32)                    # source column w-1 in range
    mask_r = (wcol <= W - 2).astype(f32)                # source column w+1 in range

    taps = []
    for k in range(9):
        ky, kx = divmod(k, 3)
        dy, dx = ky - 1, kx - 1
        start = (W + 1) + dy * W + dx                   # static, in [0, 2W+2]
        tap = y1pad[:, start:start + S]                 # (c_, S)
        if dx == -1:
            tap = tap * mask_l
        elif dx == 1:
            tap = tap * mask_r
        taps.append(tap)
    slab = jnp.concatenate(taps, axis=0).astype(mxu_dtype)      # (9*c_, S)

    x1 = jnp.dot(w2t_ref[...], slab, preferred_element_type=f32)
    x1 = _silu(x1 * s2_ref[...] + b2_ref[...])          # (c2, S) f32
    x1_mxu = x1.astype(mxu_dtype)

    # ---- coordinate attention ----
    # pool over W / pool over H / torch.cat  -> one GEMM against the constant pooling matrix
    pooled = jnp.dot(x1_mxu, pool_ref[...], preferred_element_type=f32)   # (c2, H+W)
    # conv1 (1x1, bias) + bn1 + SiLU, shared weights on both halves
    t = jnp.dot(wat_ref[...], pooled.astype(mxu_dtype), preferred_element_type=f32)
    t = _silu(t * sa_ref[...] + ba_ref[...])            # (mip, H+W)
    t_h = t[:, :H]
    t_w = t[:, H:]
    a_h = jax.nn.sigmoid(jnp.dot(wht_ref[...], t_h.astype(mxu_dtype),
                                 preferred_element_type=f32) + bh_ref[...])   # (c2, H)
    a_w = jax.nn.sigmoid(jnp.dot(wwt_ref[...], t_w.astype(mxu_dtype),
                                 preferred_element_type=f32) + bw_ref[...])   # (c2, W)
    # broadcast a_h over w and a_w over h via two tiny 0/1 expansion GEMMs (no 2D relayout)
    ah_full = jnp.dot(a_h.astype(mxu_dtype), eh_ref[...], preferred_element_type=f32)  # (c2,S)
    aw_full = jnp.dot(a_w.astype(mxu_dtype), ew_ref[...], preferred_element_type=f32)  # (c2,S)

    out = x1 * ah_full * aw_full
    if add:
        out = out + x
    out_ref[...] = out.reshape(1, c2, S).astype(out_ref.dtype)


# ----------------------------------------------------------------------------
# Wrapper: NCHW in / NCHW out (reshapes only, no transposes, no padding)
# ----------------------------------------------------------------------------

def cabottleneck_forward(x_nchw, p, shortcut=True, mxu_dtype=jnp.bfloat16):
    N, c1, H, W = x_nchw.shape
    c_ = p["w1"].shape[1]
    c2 = p["w2_hwio"].shape[3]
    mip = p["wa"].shape[1]
    S = H * W
    add = bool(shortcut and c1 == c2)
    # PyTorch module defines conv1 with c1 input channels but applies it to x1 (c2
    # channels) -> requires c1 == c2 exactly like the original code.
    assert p["wa"].shape[0] == c2, "CABottleneck requires c1 == c2 for its attention stem"

    f32 = jnp.float32
    x2d = x_nchw.reshape(N, c1, S)                       # free reshape, NCHW stays native

    # kernel-native weight layouts (tiny one-off transposes outside the kernel)
    w1t = p["w1"].T.astype(mxu_dtype)                            # (c_, c1)
    w2t = p["w2_hwio"].reshape(9 * c_, c2).T.astype(mxu_dtype)   # (c2, 9*c_)
    wat = p["wa"].T.astype(mxu_dtype)                            # (mip, c2)
    wht = p["wh"].T.astype(mxu_dtype)                            # (c2, mip)
    wwt = p["ww"].T.astype(mxu_dtype)                            # (c2, mip)
    s1 = p["s1"].reshape(c_, 1).astype(f32); b1 = p["b1"].reshape(c_, 1).astype(f32)
    s2 = p["s2"].reshape(c2, 1).astype(f32); b2 = p["b2"].reshape(c2, 1).astype(f32)
    sa = p["sa"].reshape(mip, 1).astype(f32); ba = p["ba"].reshape(mip, 1).astype(f32)
    bh = p["bh"].reshape(c2, 1).astype(f32); bw = p["bw"].reshape(c2, 1).astype(f32)

    # constant pooling / broadcast matrices (exact in bf16: entries are 0, 1, 1/W, 1/H)
    s_idx = jnp.arange(S)
    h_sel = (s_idx[:, None] // W == jnp.arange(H)[None, :]).astype(f32)   # (S, H)
    w_sel = (s_idx[:, None] % W == jnp.arange(W)[None, :]).astype(f32)    # (S, W)
    pool_mat = jnp.concatenate([h_sel / W, w_sel / H], axis=1).astype(mxu_dtype)  # (S, H+W)
    eh = h_sel.T.astype(mxu_dtype)                               # (H, S)
    ew = w_sel.T.astype(mxu_dtype)                               # (W, S)

    kernel = functools.partial(_ca_kernel, H=H, W=W, c1=c1, c_=c_, c2=c2, mip=mip,
                               add=add, mxu_dtype=mxu_dtype)

    def rep(*shape):
        return pl.BlockSpec(shape, lambda n: (0,) * len(shape))

    out = pl.pallas_call(
        kernel,
        out_shape=jax.ShapeDtypeStruct((N, c2, S), x_nchw.dtype),
        grid=(N,),
        in_specs=[
            pl.BlockSpec((1, c1, S), lambda n: (n, 0, 0)),       # image (c1, H*W)
            rep(c_, c1), rep(c_, 1), rep(c_, 1),                 # cv1 W^T, BN scale, BN bias
            rep(c2, 9 * c_), rep(c2, 1), rep(c2, 1),             # cv2 im2col W^T, BN scale/bias
            rep(S, H + W),                                       # pooling matrix
            rep(mip, c2), rep(mip, 1), rep(mip, 1),              # conv1^T, (conv1+bn1) scale/bias
            rep(c2, mip), rep(c2, 1),                            # conv_h^T, bias
            rep(c2, mip), rep(c2, 1),                            # conv_w^T, bias
            rep(H, S), rep(W, S),                                # 0/1 expansion matrices
        ],
        out_specs=pl.BlockSpec((1, c2, S), lambda n: (n, 0, 0)), # lane-dense (256-wide) store
        compiler_params=pltpu.CompilerParams(
            dimension_semantics=("parallel",),
            vmem_limit_bytes=32 * 1024 * 1024),
    )(x2d, w1t, s1, b1, w2t, s2, b2, pool_mat, wat, sa, ba, wht, bh, wwt, bw, eh, ew)
    return out.reshape(N, c2, H, W)


# ----------------------------------------------------------------------------
# Deterministic parameter init (mirrors module __init__ shapes, BN folded)
# ----------------------------------------------------------------------------

def _fold_bn(key, cout, eps=1e-5):
    k1, k2, k3, k4 = jax.random.split(key, 4)
    gamma = jax.random.uniform(k1, (cout,), minval=0.5, maxval=1.5)
    beta = jax.random.normal(k2, (cout,)) * 0.1
    mean = jax.random.normal(k3, (cout,)) * 0.1
    var = jax.random.uniform(k4, (cout,), minval=0.5, maxval=1.5)
    scale = gamma / jnp.sqrt(var + eps)
    shift = beta - mean * scale
    return scale.astype(jnp.float32), shift.astype(jnp.float32)


def init_ca_params(key, c1, c2, e=0.5, ratio=32, eps=1e-5):
    c_ = int(c2 * e)
    mip = max(8, c1 // ratio)
    ks = jax.random.split(key, 11)
    w1 = (jax.random.normal(ks[0], (c1, c_)) / (c1 ** 0.5)).astype(jnp.float32)
    s1, b1 = _fold_bn(ks[1], c_, eps)
    w2_hwio = (jax.random.normal(ks[2], (3, 3, c_, c2)) / ((9 * c_) ** 0.5)).astype(jnp.float32)
    s2, b2 = _fold_bn(ks[3], c2, eps)
    wa = (jax.random.normal(ks[4], (c1, mip)) / (c1 ** 0.5)).astype(jnp.float32)
    b_conv1 = (jax.random.normal(ks[5], (mip,)) * 0.1).astype(jnp.float32)
    sa, sha = _fold_bn(ks[6], mip, eps)
    ba = b_conv1 * sa + sha                               # conv1 bias folded through bn1
    wh = (jax.random.normal(ks[7], (mip, c2)) / (mip ** 0.5)).astype(jnp.float32)
    bh = (jax.random.normal(ks[8], (c2,)) * 0.1).astype(jnp.float32)
    ww = (jax.random.normal(ks[9], (mip, c2)) / (mip ** 0.5)).astype(jnp.float32)
    bw = (jax.random.normal(ks[10], (c2,)) * 0.1).astype(jnp.float32)
    return dict(w1=w1, s1=s1, b1=b1, w2_hwio=w2_hwio, s2=s2, b2=b2,
                wa=wa, sa=sa, ba=ba, wh=wh, bh=bh, ww=ww, bw=bw)


# ----------------------------------------------------------------------------
# Pure-JAX reference (mirrors the PyTorch math) for correctness checking
# ----------------------------------------------------------------------------

def ref_forward(x_nchw, p, shortcut=True):
    N, c1, H, W = x_nchw.shape
    c2 = p["w2_hwio"].shape[-1]
    add = shortcut and c1 == c2
    hi = jax.lax.Precision.HIGHEST
    x = jnp.transpose(x_nchw, (0, 2, 3, 1))              # NHWC
    y = jnp.einsum("nhwc,cd->nhwd", x, p["w1"], precision=hi) * p["s1"] + p["b1"]
    y = y * jax.nn.sigmoid(y)
    x1 = jax.lax.conv_general_dilated(
        y, p["w2_hwio"], (1, 1), "SAME",
        dimension_numbers=("NHWC", "HWIO", "NHWC"), precision=hi)
    x1 = x1 * p["s2"] + p["b2"]
    x1 = x1 * jax.nn.sigmoid(x1)
    x_h = jnp.mean(x1, axis=2)                           # (N, H, c2)
    x_w = jnp.mean(x1, axis=1)                           # (N, W, c2)
    yc = jnp.concatenate([x_h, x_w], axis=1)             # (N, H+W, c2)
    t = jnp.einsum("npc,cm->npm", yc, p["wa"], precision=hi) * p["sa"] + p["ba"]
    t = t * jax.nn.sigmoid(t)
    t_h, t_w = t[:, :H, :], t[:, H:, :]
    a_h = jax.nn.sigmoid(jnp.einsum("nhm,mc->nhc", t_h, p["wh"], precision=hi) + p["bh"])
    a_w = jax.nn.sigmoid(jnp.einsum("nwm,mc->nwc", t_w, p["ww"], precision=hi) + p["bw"])
    out = x1 * a_w[:, None, :, :] * a_h[:, :, None, :]
    if add:
        out = out + x
    return jnp.transpose(out, (0, 3, 1, 2))


# ----------------------------------------------------------------------------

if __name__ == "__main__":
    key = jax.random.PRNGKey(0)
    k_x, k_p = jax.random.split(key)

    N, c1, c2, H, W = 2, 16, 16, 16, 16                  # c_ = 8, mip = max(8, 16//32) = 8
    x = jax.random.normal(k_x, (N, c1, H, W), dtype=jnp.float32)   # NCHW like PyTorch
    params = init_ca_params(k_p, c1, c2, e=0.5, ratio=32)

    ref = jax.block_until_ready(ref_forward(x, params, shortcut=True))

    # f32-MXU path: tight check of the kernel semantics
    out_f32 = jax.block_until_ready(
        cabottleneck_forward(x, params, shortcut=True, mxu_dtype=jnp.float32))
    assert out_f32.shape == (N, c2, H, W), out_f32.shape
    assert jnp.allclose(out_f32, ref, rtol=1e-3, atol=1e-3), \
        float(jnp.max(jnp.abs(out_f32 - ref)))

    # default bf16-MXU path (v6e/v7x fast path), f32 accumulate + f32 elementwise: loose check
    out_bf16 = jax.block_until_ready(
        cabottleneck_forward(x, params, shortcut=True, mxu_dtype=jnp.bfloat16))
    assert out_bf16.shape == (N, c2, H, W), out_bf16.shape
    assert jnp.allclose(out_bf16, ref, rtol=5e-2, atol=1e-1), \
        float(jnp.max(jnp.abs(out_bf16 - ref)))

    print("KERNEL_OK")
</pallas_src>

<mosaic_0001>
module attributes {stable_mosaic.version = 11 : i64} {
  func.func @_ca_kernel(%arg0: i32, %arg1: memref<1x16x256xf32, #tpu.memory_space<vmem>>, %arg2: memref<8x16xf32, #tpu.memory_space<vmem>>, %arg3: memref<8x1xf32, #tpu.memory_space<vmem>>, %arg4: memref<8x1xf32, #tpu.memory_space<vmem>>, %arg5: memref<16x72xf32, #tpu.memory_space<vmem>>, %arg6: memref<16x1xf32, #tpu.memory_space<vmem>>, %arg7: memref<16x1xf32, #tpu.memory_space<vmem>>, %arg8: memref<256x32xf32, #tpu.memory_space<vmem>>, %arg9: memref<8x16xf32, #tpu.memory_space<vmem>>, %arg10: memref<8x1xf32, #tpu.memory_space<vmem>>, %arg11: memref<8x1xf32, #tpu.memory_space<vmem>>, %arg12: memref<16x8xf32, #tpu.memory_space<vmem>>, %arg13: memref<16x1xf32, #tpu.memory_space<vmem>>, %arg14: memref<16x8xf32, #tpu.memory_space<vmem>>, %arg15: memref<16x1xf32, #tpu.memory_space<vmem>>, %arg16: memref<16x256xf32, #tpu.memory_space<vmem>>, %arg17: memref<16x256xf32, #tpu.memory_space<vmem>>, %arg18: memref<1x16x256xf32, #tpu.memory_space<vmem>>) attributes {dimension_semantics = [#tpu.dimension_semantics<parallel>], iteration_bounds = array<i64: 2>, scalar_prefetch = 0 : i64, scratch_operands = 0 : i64, tpu.core_type = #tpu.core_type<tc>, window_params = [{transform_indices = @transform_0, window_bounds = array<i64: 1, 16, 256>}, {pipeline_mode = #tpu.pipeline_mode<synchronous>, transform_indices = @transform_1, window_bounds = array<i64: 8, 16>}, {pipeline_mode = #tpu.pipeline_mode<synchronous>, transform_indices = @transform_2, window_bounds = array<i64: 8, 1>}, {pipeline_mode = #tpu.pipeline_mode<synchronous>, transform_indices = @transform_3, window_bounds = array<i64: 8, 1>}, {pipeline_mode = #tpu.pipeline_mode<synchronous>, transform_indices = @transform_4, window_bounds = array<i64: 16, 72>}, {pipeline_mode = #tpu.pipeline_mode<synchronous>, transform_indices = @transform_5, window_bounds = array<i64: 16, 1>}, {pipeline_mode = #tpu.pipeline_mode<synchronous>, transform_indices = @transform_6, window_bounds = array<i64: 16, 1>}, {pipeline_mode = #tpu.pipeline_mode<synchronous>, transform_indices = @transform_7, window_bounds = array<i64: 256, 32>}, {pipeline_mode = #tpu.pipeline_mode<synchronous>, transform_indices = @transform_8, window_bounds = array<i64: 8, 16>}, {pipeline_mode = #tpu.pipeline_mode<synchronous>, transform_indices = @transform_9, window_bounds = array<i64: 8, 1>}, {pipeline_mode = #tpu.pipeline_mode<synchronous>, transform_indices = @transform_10, window_bounds = array<i64: 8, 1>}, {pipeline_mode = #tpu.pipeline_mode<synchronous>, transform_indices = @transform_11, window_bounds = array<i64: 16, 8>}, {pipeline_mode = #tpu.pipeline_mode<synchronous>, transform_indices = @transform_12, window_bounds = array<i64: 16, 1>}, {pipeline_mode = #tpu.pipeline_mode<synchronous>, transform_indices = @transform_13, window_bounds = array<i64: 16, 8>}, {pipeline_mode = #tpu.pipeline_mode<synchronous>, transform_indices = @transform_14, window_bounds = array<i64: 16, 1>}, {pipeline_mode = #tpu.pipeline_mode<synchronous>, transform_indices = @transform_15, window_bounds = array<i64: 16, 256>}, {pipeline_mode = #tpu.pipeline_mode<synchronous>, transform_indices = @transform_16, window_bounds = array<i64: 16, 256>}, {transform_indices = @transform_17, window_bounds = array<i64: 1, 16, 256>}]} {
    %c0 = arith.constant 0 : index
    %c0_0 = arith.constant 0 : index
    %c0_1 = arith.constant 0 : index
    %0 = vector.load %arg1[%c0, %c0_0, %c0_1] : memref<1x16x256xf32, #tpu.memory_space<vmem>>, vector<1x16x256xf32>
    %1 = vector.shape_cast %0 : vector<1x16x256xf32> to vector<16x256xf32>
    %c0_2 = arith.constant 0 : index
    %c0_3 = arith.constant 0 : index
    %2 = vector.load %arg2[%c0_2, %c0_3] : memref<8x16xf32, #tpu.memory_space<vmem>>, vector<8x16xf32>
    %cst = arith.constant dense<0.000000e+00> : vector<8x256xf32>
    %3 = tpu.matmul %2, %1, %cst {dimension_numbers = #tpu.dot_dimension_numbers<[1], [0], [0], [1], [0, 0, 1, 1], [], []>} : vector<8x16xf32>, vector<16x256xf32>, vector<8x256xf32> -> vector<8x256xf32>
    %c0_4 = arith.constant 0 : index
    %c0_5 = arith.constant 0 : index
    %4 = vector.load %arg3[%c0_4, %c0_5] : memref<8x1xf32, #tpu.memory_space<vmem>>, vector<8x1xf32>
    %5 = vector.broadcast %4 : vector<8x1xf32> to vector<8x256xf32>
    %6 = arith.mulf %3, %5 : vector<8x256xf32>
    %c0_6 = arith.constant 0 : index
    %c0_7 = arith.constant 0 : index
    %7 = vector.load %arg4[%c0_6, %c0_7] : memref<8x1xf32, #tpu.memory_space<vmem>>, vector<8x1xf32>
    %8 = vector.broadcast %7 : vector<8x1xf32> to vector<8x256xf32>
    %9 = arith.addf %6, %8 : vector<8x256xf32>
    %10 = arith.negf %9 : vector<8x256xf32>
    %11 = math.exp %10 : vector<8x256xf32>
    %cst_8 = arith.constant 1.000000e+00 : f32
    %12 = vector.broadcast %cst_8 : f32 to vector<8x256xf32>
    %13 = arith.addf %12, %11 : vector<8x256xf32>
    %14 = arith.divf %12, %13 : vector<8x256xf32>
    %15 = arith.mulf %9, %14 : vector<8x256xf32>
    %cst_9 = arith.constant 0.000000e+00 : f32
    %16 = vector.broadcast %cst_9 : f32 to vector<8x17xf32>
    %17 = tpu.concatenate %16, %15, %16 in 1 : vector<8x17xf32>, vector<8x256xf32>, vector<8x17xf32> -> vector<8x290xf32>
    %18 = tpu.iota {dimensions = array<i32: 1>} : vector<1x256xi32>
    %c16_i32 = arith.constant 16 : i32
    %c0_i32 = arith.constant 0 : i32
    %19 = arith.cmpi eq, %c16_i32, %c0_i32 : i32
    %c1_i32 = arith.constant 1 : i32
    %20 = arith.select %19, %c1_i32, %c16_i32 : i32
    %21 = vector.broadcast %20 : i32 to vector<1x256xi32>
    %22 = arith.remsi %18, %21 : vector<1x256xi32>
    %c0_i32_10 = arith.constant 0 : i32
    %23 = vector.broadcast %c0_i32_10 : i32 to vector<1x256xi32>
    %24 = arith.cmpi ne, %22, %23 : vector<1x256xi32>
    %c0_i32_11 = arith.constant 0 : i32
    %25 = vector.broadcast %c0_i32_11 : i32 to vector<1x256xi32>
    %26 = arith.cmpi slt, %22, %25 : vector<1x256xi32>
    %c0_i32_12 = arith.constant 0 : i32
    %27 = arith.cmpi slt, %20, %c0_i32_12 : i32
    %28 = vector.broadcast %27 : i1 to vector<1x256xi1>
    %29 = vector.broadcast %28 : vector<1x256xi1> to vector<1x256xi1>
    %30 = arith.xori %26, %29 : vector<1x256xi1>
    %31 = arith.andi %30, %24 : vector<1x256xi1>
    %32 = vector.broadcast %20 : i32 to vector<1x256xi32>
    %33 = arith.addi %22, %32 : vector<1x256xi32>
    %34 = arith.select %31, %33, %22 : vector<1x256xi1>, vector<1x256xi32>
    %c1_i32_13 = arith.constant 1 : i32
    %35 = vector.broadcast %c1_i32_13 : i32 to vector<1x256xi32>
    %36 = arith.cmpi sge, %34, %35 : vector<1x256xi32>
    %37 = arith.extui %36 : vector<1x256xi1> to vector<1x256xi32>
    %38 = arith.sitofp %37 : vector<1x256xi32> to vector<1x256xf32>
    %c14_i32 = arith.constant 14 : i32
    %39 = vector.broadcast %c14_i32 : i32 to vector<1x256xi32>
    %40 = arith.cmpi sle, %34, %39 : vector<1x256xi32>
    %41 = arith.extui %40 : vector<1x256xi1> to vector<1x256xi32>
    %42 = arith.sitofp %41 : vector<1x256xi32> to vector<1x256xf32>
    %43 = vector.extract_strided_slice %17 {offsets = [0, 0], sizes = [8, 256], strides = [1, 1]} : vector<8x290xf32> to vector<8x256xf32>
    %44 = vector.broadcast %38 : vector<1x256xf32> to vector<8x256xf32>
    %45 = arith.mulf %43, %44 : vector<8x256xf32>
    %46 = vector.extract_strided_slice %17 {offsets = [0, 1], sizes = [8, 256], strides = [1, 1]} : vector<8x290xf32> to vector<8x256xf32>
    %47 = vector.extract_strided_slice %17 {offsets = [0, 2], sizes = [8, 256], strides = [1, 1]} : vector<8x290xf32> to vector<8x256xf32>
    %48 = vector.broadcast %42 : vector<1x256xf32> to vector<8x256xf32>
    %49 = arith.mulf %47, %48 : vector<8x256xf32>
    %50 = vector.extract_strided_slice %17 {offsets = [0, 16], sizes = [8, 256], strides = [1, 1]} : vector<8x290xf32> to vector<8x256xf32>
    %51 = vector.broadcast %38 : vector<1x256xf32> to vector<8x256xf32>
    %52 = arith.mulf %50, %51 : vector<8x256xf32>
    %53 = vector.extract_strided_slice %17 {offsets = [0, 17], sizes = [8, 256], strides = [1, 1]} : vector<8x290xf32> to vector<8x256xf32>
    %54 = vector.extract_strided_slice %17 {offsets = [0, 18], sizes = [8, 256], strides = [1, 1]} : vector<8x290xf32> to vector<8x256xf32>
    %55 = vector.broadcast %42 : vector<1x256xf32> to vector<8x256xf32>
    %56 = arith.mulf %54, %55 : vector<8x256xf32>
    %57 = vector.extract_strided_slice %17 {offsets = [0, 32], sizes = [8, 256], strides = [1, 1]} : vector<8x290xf32> to vector<8x256xf32>
    %58 = vector.broadcast %38 : vector<1x256xf32> to vector<8x256xf32>
    %59 = arith.mulf %57, %58 : vector<8x256xf32>
    %60 = vector.extract_strided_slice %17 {offsets = [0, 33], sizes = [8, 256], strides = [1, 1]} : vector<8x290xf32> to vector<8x256xf32>
    %61 = vector.extract_strided_slice %17 {offsets = [0, 34], sizes = [8, 256], strides = [1, 1]} : vector<8x290xf32> to vector<8x256xf32>
    %62 = vector.broadcast %42 : vector<1x256xf32> to vector<8x256xf32>
    %63 = arith.mulf %61, %62 : vector<8x256xf32>
    %64 = tpu.concatenate %45, %46, %49, %52, %53, %56, %59, %60, %63 in 0 : vector<8x256xf32>, vector<8x256xf32>, vector<8x256xf32>, vector<8x256xf32>, vector<8x256xf32>, vector<8x256xf32>, vector<8x256xf32>, vector<8x256xf32>, vector<8x256xf32> -> vector<72x256xf32>
    %c0_14 = arith.constant 0 : index
    %c0_15 = arith.constant 0 : index
    %65 = vector.load %arg5[%c0_14, %c0_15] : memref<16x72xf32, #tpu.memory_space<vmem>>, vector<16x72xf32>
    %cst_16 = arith.constant dense<0.000000e+00> : vector<16x256xf32>
    %66 = tpu.matmul %65, %64, %cst_16 {dimension_numbers = #tpu.dot_dimension_numbers<[1], [0], [0], [1], [0, 0, 1, 1], [], []>} : vector<16x72xf32>, vector<72x256xf32>, vector<16x256xf32> -> vector<16x256xf32>
    %c0_17 = arith.constant 0 : index
    %c0_18 = arith.constant 0 : index
    %67 = vector.load %arg6[%c0_17, %c0_18] : memref<16x1xf32, #tpu.memory_space<vmem>>, vector<16x1xf32>
    %68 = vector.broadcast %67 : vector<16x1xf32> to vector<16x256xf32>
    %69 = arith.mulf %66, %68 : vector<16x256xf32>
    %c0_19 = arith.constant 0 : index
    %c0_20 = arith.constant 0 : index
    %70 = vector.load %arg7[%c0_19, %c0_20] : memref<16x1xf32, #tpu.memory_space<vmem>>, vector<16x1xf32>
    %71 = vector.broadcast %70 : vector<16x1xf32> to vector<16x256xf32>
    %72 = arith.addf %69, %71 : vector<16x256xf32>
    %73 = arith.negf %72 : vector<16x256xf32>
    %74 = math.exp %73 : vector<16x256xf32>
    %cst_21 = arith.constant 1.000000e+00 : f32
    %75 = vector.broadcast %cst_21 : f32 to vector<16x256xf32>
    %76 = arith.addf %75, %74 : vector<16x256xf32>
    %77 = arith.divf %75, %76 : vector<16x256xf32>
    %78 = arith.mulf %72, %77 : vector<16x256xf32>
    %c0_22 = arith.constant 0 : index
    %c0_23 = arith.constant 0 : index
    %79 = vector.load %arg8[%c0_22, %c0_23] : memref<256x32xf32, #tpu.memory_space<vmem>>, vector<256x32xf32>
    %cst_24 = arith.constant dense<0.000000e+00> : vector<16x32xf32>
    %80 = tpu.matmul %78, %79, %cst_24 {dimension_numbers = #tpu.dot_dimension_numbers<[1], [0], [0], [1], [0, 0, 1, 1], [], []>} : vector<16x256xf32>, vector<256x32xf32>, vector<16x32xf32> -> vector<16x32xf32>
    %c0_25 = arith.constant 0 : index
    %c0_26 = arith.constant 0 : index
    %81 = vector.load %arg9[%c0_25, %c0_26] : memref<8x16xf32, #tpu.memory_space<vmem>>, vector<8x16xf32>
    %cst_27 = arith.constant dense<0.000000e+00> : vector<8x32xf32>
    %82 = tpu.matmul %81, %80, %cst_27 {dimension_numbers = #tpu.dot_dimension_numbers<[1], [0], [0], [1], [0, 0, 1, 1], [], []>} : vector<8x16xf32>, vector<16x32xf32>, vector<8x32xf32> -> vector<8x32xf32>
    %c0_28 = arith.constant 0 : index
    %c0_29 = arith.constant 0 : index
    %83 = vector.load %arg10[%c0_28, %c0_29] : memref<8x1xf32, #tpu.memory_space<vmem>>, vector<8x1xf32>
    %84 = vector.broadcast %83 : vector<8x1xf32> to vector<8x32xf32>
    %85 = arith.mulf %82, %84 : vector<8x32xf32>
    %c0_30 = arith.constant 0 : index
    %c0_31 = arith.constant 0 : index
    %86 = vector.load %arg11[%c0_30, %c0_31] : memref<8x1xf32, #tpu.memory_space<vmem>>, vector<8x1xf32>
    %87 = vector.broadcast %86 : vector<8x1xf32> to vector<8x32xf32>
    %88 = arith.addf %85, %87 : vector<8x32xf32>
    %89 = arith.negf %88 : vector<8x32xf32>
    %90 = math.exp %89 : vector<8x32xf32>
    %cst_32 = arith.constant 1.000000e+00 : f32
    %91 = vector.broadcast %cst_32 : f32 to vector<8x32xf32>
    %92 = arith.addf %91, %90 : vector<8x32xf32>
    %93 = arith.divf %91, %92 : vector<8x32xf32>
    %94 = arith.mulf %88, %93 : vector<8x32xf32>
    %95 = vector.extract_strided_slice %94 {offsets = [0, 0], sizes = [8, 16], strides = [1, 1]} : vector<8x32xf32> to vector<8x16xf32>
    %96 = vector.extract_strided_slice %94 {offsets = [0, 16], sizes = [8, 16], strides = [1, 1]} : vector<8x32xf32> to vector<8x16xf32>
    %c0_33 = arith.constant 0 : index
    %c0_34 = arith.constant 0 : index
    %97 = vector.load %arg12[%c0_33, %c0_34] : memref<16x8xf32, #tpu.memory_space<vmem>>, vector<16x8xf32>
    %cst_35 = arith.constant dense<0.000000e+00> : vector<16x16xf32>
    %98 = tpu.matmul %97, %95, %cst_35 {dimension_numbers = #tpu.dot_dimension_numbers<[1], [0], [0], [1], [0, 0, 1, 1], [], []>} : vector<16x8xf32>, vector<8x16xf32>, vector<16x16xf32> -> vector<16x16xf32>
    %c0_36 = arith.constant 0 : index
    %c0_37 = arith.constant 0 : index
    %99 = vector.load %arg13[%c0_36, %c0_37] : memref<16x1xf32, #tpu.memory_space<vmem>>, vector<16x1xf32>
    %100 = vector.broadcast %99 : vector<16x1xf32> to vector<16x16xf32>
    %101 = arith.addf %98, %100 : vector<16x16xf32>
    %102 = arith.negf %101 : vector<16x16xf32>
    %103 = math.exp %102 : vector<16x16xf32>
    %cst_38 = arith.constant 1.000000e+00 : f32
    %104 = vector.broadcast %cst_38 : f32 to vector<16x16xf32>
    %105 = arith.addf %104, %103 : vector<16x16xf32>
    %106 = arith.divf %104, %105 : vector<16x16xf32>
    %c0_39 = arith.constant 0 : index
    %c0_40 = arith.constant 0 : index
    %107 = vector.load %arg14[%c0_39, %c0_40] : memref<16x8xf32, #tpu.memory_space<vmem>>, vector<16x8xf32>
    %cst_41 = arith.constant dense<0.000000e+00> : vector<16x16xf32>
    %108 = tpu.matmul %107, %96, %cst_41 {dimension_numbers = #tpu.dot_dimension_numbers<[1], [0], [0], [1], [0, 0, 1, 1], [], []>} : vector<16x8xf32>, vector<8x16xf32>, vector<16x16xf32> -> vector<16x16xf32>
    %c0_42 = arith.constant 0 : index
    %c0_43 = arith.constant 0 : index
    %109 = vector.load %arg15[%c0_42, %c0_43] : memref<16x1xf32, #tpu.memory_space<vmem>>, vector<16x1xf32>
    %110 = vector.broadcast %109 : vector<16x1xf32> to vector<16x16xf32>
    %111 = arith.addf %108, %110 : vector<16x16xf32>
    %112 = arith.negf %111 : vector<16x16xf32>
    %113 = math.exp %112 : vector<16x16xf32>
    %cst_44 = arith.constant 1.000000e+00 : f32
    %114 = vector.broadcast %cst_44 : f32 to vector<16x16xf32>
    %115 = arith.addf %114, %113 : vector<16x16xf32>
    %116 = arith.divf %114, %115 : vector<16x16xf32>
    %c0_45 = arith.constant 0 : index
    %c0_46 = arith.constant 0 : index
    %117 = vector.load %arg16[%c0_45, %c0_46] : memref<16x256xf32, #tpu.memory_space<vmem>>, vector<16x256xf32>
    %cst_47 = arith.constant dense<0.000000e+00> : vector<16x256xf32>
    %118 = tpu.matmul %106, %117, %cst_47 {dimension_numbers = #tpu.dot_dimension_numbers<[1], [0], [0], [1], [0, 0, 1, 1], [], []>} : vector<16x16xf32>, vector<16x256xf32>, vector<16x256xf32> -> vector<16x256xf32>
    %c0_48 = arith.constant 0 : index
    %c0_49 = arith.constant 0 : index
    %119 = vector.load %arg17[%c0_48, %c0_49] : memref<16x256xf32, #tpu.memory_space<vmem>>, vector<16x256xf32>
    %cst_50 = arith.constant dense<0.000000e+00> : vector<16x256xf32>
    %120 = tpu.matmul %116, %119, %cst_50 {dimension_numbers = #tpu.dot_dimension_numbers<[1], [0], [0], [1], [0, 0, 1, 1], [], []>} : vector<16x16xf32>, vector<16x256xf32>, vector<16x256xf32> -> vector<16x256xf32>
    %121 = arith.mulf %78, %118 : vector<16x256xf32>
    %122 = arith.mulf %121, %120 : vector<16x256xf32>
    %123 = arith.addf %122, %1 : vector<16x256xf32>
    %124 = vector.shape_cast %123 : vector<16x256xf32> to vector<1x16x256xf32>
    %c0_51 = arith.constant 0 : index
    %c0_52 = arith.constant 0 : index
    %c0_53 = arith.constant 0 : index
    %125 = vector.load %arg18[%c0_51, %c0_52, %c0_53] : memref<1x16x256xf32, #tpu.memory_space<vmem>>, vector<1x16x256xf32>
    tpu.vector_store %arg18[%c0_51, %c0_52, %c0_53], %124 {strides = array<i32>} : memref<1x16x256xf32, #tpu.memory_space<vmem>>, vector<1x16x256xf32>,
    return
  }
  func.func @transform_0(%arg0: i32) -> (i32, i32, i32) {
    %c0_i32 = arith.constant 0 : i32
    %c0_i32_0 = arith.constant 0 : i32
    %c0_i32_1 = arith.constant 0 : i32
    return %arg0, %c0_i32, %c0_i32_0 : i32, i32, i32
  }
  func.func @transform_1(%arg0: i32) -> (i32, i32) {
    %c0_i32 = arith.constant 0 : i32
    %c0_i32_0 = arith.constant 0 : i32
    %c0_i32_1 = arith.constant 0 : i32
    return %c0_i32, %c0_i32_0 : i32, i32
  }
  func.func @transform_2(%arg0: i32) -> (i32, i32) {
    %c0_i32 = arith.constant 0 : i32
    %c0_i32_0 = arith.constant 0 : i32
    %c0_i32_1 = arith.constant 0 : i32
    return %c0_i32, %c0_i32_0 : i32, i32
  }
  func.func @transform_3(%arg0: i32) -> (i32, i32) {
    %c0_i32 = arith.constant 0 : i32
    %c0_i32_0 = arith.constant 0 : i32
    %c0_i32_1 = arith.constant 0 : i32
    return %c0_i32, %c0_i32_0 : i32, i32
  }
  func.func @transform_4(%arg0: i32) -> (i32, i32) {
    %c0_i32 = arith.constant 0 : i32
    %c0_i32_0 = arith.constant 0 : i32
    %c0_i32_1 = arith.constant 0 : i32
    return %c0_i32, %c0_i32_0 : i32, i32
  }
  func.func @transform_5(%arg0: i32) -> (i32, i32) {
    %c0_i32 = arith.constant 0 : i32
    %c0_i32_0 = arith.constant 0 : i32
    %c0_i32_1 = arith.constant 0 : i32
    return %c0_i32, %c0_i32_0 : i32, i32
  }
  func.func @transform_6(%arg0: i32) -> (i32, i32) {
    %c0_i32 = arith.constant 0 : i32
    %c0_i32_0 = arith.constant 0 : i32
    %c0_i32_1 = arith.constant 0 : i32
    return %c0_i32, %c0_i32_0 : i32, i32
  }
  func.func @transform_7(%arg0: i32) -> (i32, i32) {
    %c0_i32 = arith.constant 0 : i32
    %c0_i32_0 = arith.constant 0 : i32
    %c0_i32_1 = arith.constant 0 : i32
    return %c0_i32, %c0_i32_0 : i32, i32
  }
  func.func @transform_8(%arg0: i32) -> (i32, i32) {
    %c0_i32 = arith.constant 0 : i32
    %c0_i32_0 = arith.constant 0 : i32
    %c0_i32_1 = arith.constant 0 : i32
    return %c0_i32, %c0_i32_0 : i32, i32
  }
  func.func @transform_9(%arg0: i32) -> (i32, i32) {
    %c0_i32 = arith.constant 0 : i32
    %c0_i32_0 = arith.constant 0 : i32
    %c0_i32_1 = arith.constant 0 : i32
    return %c0_i32, %c0_i32_0 : i32, i32
  }
  func.func @transform_10(%arg0: i32) -> (i32, i32) {
    %c0_i32 = arith.constant 0 : i32
    %c0_i32_0 = arith.constant 0 : i32
    %c0_i32_1 = arith.constant 0 : i32
    return %c0_i32, %c0_i32_0 : i32, i32
  }
  func.func @transform_11(%arg0: i32) -> (i32, i32) {
    %c0_i32 = arith.constant 0 : i32
    %c0_i32_0 = arith.constant 0 : i32
    %c0_i32_1 = arith.constant 0 : i32
    return %c0_i32, %c0_i32_0 : i32, i32
  }
  func.func @transform_12(%arg0: i32) -> (i32, i32) {
    %c0_i32 = arith.constant 0 : i32
    %c0_i32_0 = arith.constant 0 : i32
    %c0_i32_1 = arith.constant 0 : i32
    return %c0_i32, %c0_i32_0 : i32, i32
  }
  func.func @transform_13(%arg0: i32) -> (i32, i32) {
    %c0_i32 = arith.constant 0 : i32
    %c0_i32_0 = arith.constant 0 : i32
    %c0_i32_1 = arith.constant 0 : i32
    return %c0_i32, %c0_i32_0 : i32, i32
  }
  func.func @transform_14(%arg0: i32) -> (i32, i32) {
    %c0_i32 = arith.constant 0 : i32
    %c0_i32_0 = arith.constant 0 : i32
    %c0_i32_1 = arith.constant 0 : i32
    return %c0_i32, %c0_i32_0 : i32, i32
  }
  func.func @transform_15(%arg0: i32) -> (i32, i32) {
    %c0_i32 = arith.constant 0 : i32
    %c0_i32_0 = arith.constant 0 : i32
    %c0_i32_1 = arith.constant 0 : i32
    return %c0_i32, %c0_i32_0 : i32, i32
  }
  func.func @transform_16(%arg0: i32) -> (i32, i32) {
    %c0_i32 = arith.constant 0 : i32
    %c0_i32_0 = arith.constant 0 : i32
    %c0_i32_1 = arith.constant 0 : i32
    return %c0_i32, %c0_i32_0 : i32, i32
  }
  func.func @transform_17(%arg0: i32) -> (i32, i32, i32) {
    %c0_i32 = arith.constant 0 : i32
    %c0_i32_0 = arith.constant 0 : i32
    %c0_i32_1 = arith.constant 0 : i32
    return %arg0, %c0_i32, %c0_i32_0 : i32, i32, i32
  }
}

</mosaic_0001>

<llo_original>
// kernel: tpu_custom_call.1
$region0: #{tpu_custom_call.1}
  #allocation0 [shape = 'u32[]', space=smem, size = 0x4, offset = 0x4, fixed_abs, tag = 'smem constant byte address 0x4 - core index']
  #allocation1 [shape = 'u32[72,128]{1,0:T(1,128)}', space=vmem, size = 0x9000, scoped, tag = 'internal scratch']
  %s0 = inlined_call_operand.vmem [shape: f32[2,16,256], index: 0, kind: input, shape index: {}]
  %s1 = inlined_call_operand.vmem [shape: f32[8,16], index: 1, kind: input, shape index: {}]
  %s2 = inlined_call_operand.vmem [shape: f32[8,1], index: 2, kind: input, shape index: {}]
  %s3 = inlined_call_operand.vmem [shape: f32[8,1], index: 3, kind: input, shape index: {}]
  %s4 = inlined_call_operand.vmem [shape: f32[16,72], index: 4, kind: input, shape index: {}]
  %s5 = inlined_call_operand.vmem [shape: f32[16,1], index: 5, kind: input, shape index: {}]
  %s6 = inlined_call_operand.vmem [shape: f32[16,1], index: 6, kind: input, shape index: {}]
  %s7 = inlined_call_operand.vmem [shape: f32[256,32], index: 7, kind: input, shape index: {}]
  %s8 = inlined_call_operand.vmem [shape: f32[8,16], index: 8, kind: input, shape index: {}]
  %s9 = inlined_call_operand.vmem [shape: f32[8,1], index: 9, kind: input, shape index: {}]
  %s10 = inlined_call_operand.vmem [shape: f32[8,1], index: 10, kind: input, shape index: {}]
  %s11 = inlined_call_operand.vmem [shape: f32[16,8], index: 11, kind: input, shape index: {}]
  %s12 = inlined_call_operand.vmem [shape: f32[16,1], index: 12, kind: input, shape index: {}]
  %s13 = inlined_call_operand.vmem [shape: f32[16,8], index: 13, kind: input, shape index: {}]
  %s14 = inlined_call_operand.vmem [shape: f32[16,1], index: 14, kind: input, shape index: {}]
  %s15 = inlined_call_operand.vmem [shape: f32[16,256], index: 15, kind: input, shape index: {}]
  %s16 = inlined_call_operand.vmem [shape: f32[16,256], index: 16, kind: input, shape index: {}]
  %s17 = inlined_call_operand.hbm [shape: f32[2,16,256], index: 17, kind: output, shape index: {}]
  %s18 = sld [smem:[#allocation0]]
  $region101: #{tpu_custom_call.1} parent=0
    _
  %s20 = ssub.s32 1, %s18
  %s21 = scalar_select 0, %s20, %s18
  $region1: #{tpu_custom_call.1} parent=0
    #allocation2 [shape = 'u8[32768]{0}', space=vmem, size = 0x8000, scoped, tag = 'output window, operand 0']
    #allocation3 [shape = 's32[2]{0}', space=sflag, size = 0x8, scoped, tag = 'scoped memory for tpu_custom_call.1']
    %22 = vsyncpa [#allocation3], 0
    %s23 = scalar_lea.sflag [#allocation3], 1
    %24 = vsyncpa %s23, 0
    loop: start=0, step=1, limit=4
    $region2: #{tpu_custom_call.1} parent=1 // loop_pre_header
      _
    $region3: #{tpu_custom_call.1} parent=1 // loop_header
      %s26 = sphi 0, %s30
      %p27 = scmp.ge.s32.totalorder %s26, 4
      %s36 = sphi 0, %s38
      %s39 = sphi 0, %s36
      %s40 = sphi 0, %s39
      %s56 = sphi 0, %s40
      %s60 = sphi 0, %s60
      %s62 = sphi 0, %s60
      %s63 = sphi 0, %s62
      %s77 = sphi 0, %s63
      %s81 = sphi 0, %s81
      %s83 = sphi 0, %s81
      %s84 = sphi 0, %s83
      %s98 = sphi 0, %s84
      %s102 = sphi 0, %s102
      %s104 = sphi 0, %s102
      %s105 = sphi 0, %s104
      %s119 = sphi 0, %s105
      %s123 = sphi 0, %s123
      %s125 = sphi 0, %s123
      %s126 = sphi 0, %s125
      %s140 = sphi 0, %s126
      %s144 = sphi 0, %s144
      %s146 = sphi 0, %s144
      %s147 = sphi 0, %s146
      %s161 = sphi 0, %s147
      %s165 = sphi 0, %s165
      %s167 = sphi 0, %s165
      %s168 = sphi 0, %s167
      %s182 = sphi 0, %s168
      %s186 = sphi 0, %s186
      %s188 = sphi 0, %s186
      %s189 = sphi 0, %s188
      %s203 = sphi 0, %s189
      %s207 = sphi 0, %s207
      %s209 = sphi 0, %s207
      %s210 = sphi 0, %s209
      %s224 = sphi 0, %s210
      %s228 = sphi 0, %s228
      %s230 = sphi 0, %s228
      %s231 = sphi 0, %s230
      %s245 = sphi 0, %s231
      %s249 = sphi 0, %s249
      %s251 = sphi 0, %s249
      %s252 = sphi 0, %s251
      %s266 = sphi 0, %s252
      %s270 = sphi 0, %s270
      %s272 = sphi 0, %s270
      %s273 = sphi 0, %s272
      %s287 = sphi 0, %s273
      %s291 = sphi 0, %s291
      %s293 = sphi 0, %s291
      %s294 = sphi 0, %s293
      %s308 = sphi 0, %s294
      %s312 = sphi 0, %s312
      %s314 = sphi 0, %s312
      %s315 = sphi 0, %s314
      %s329 = sphi 0, %s315
      %s333 = sphi 0, %s333
      %s335 = sphi 0, %s333
      %s336 = sphi 0, %s335
      %s350 = sphi 0, %s336
      %s354 = sphi 0, %s354
      %s356 = sphi 0, %s354
      %s357 = sphi 0, %s356
      %s371 = sphi 0, %s357
      %s375 = sphi 0, %s375
      %s377 = sphi 0, %s375
      %s378 = sphi 0, %s377
      %s392 = sphi 0, %s378
      %s398 = sphi 0, %s400
      %s401 = sphi 0, %s398
      %s402 = sphi 0, %s401
      %s418 = sphi 0, %s402
    $region4: #{tpu_custom_call.1} parent=1 // loop_header_branch
      %29 = sbr.rel (%p27) target = $region8
    $region5: #{tpu_custom_call.1} parent=1 // loop_body
      %s31 = ssub.s32 %s26, 1
      %s32 = ssub.s32 %s26, 2
      %s33 = sadd.s32 %s26, 1
      %s34 = ssub.s32 %s26, %s33
      %p35 = scmp.eq.s32.totalorder %s34, 0
      %s37 = sadd.s32 %s36, 1
      %s38 = scalar_select %p35, %s36, %s37
      %p41 = pneg %p35
      %p42 = scmp.eq.s32.totalorder %s26, 1
      %p43 = por %p41, %p42
      %p44 = scmp.ne.s32.totalorder %s36, %s39
      %p45 = scmp.eq.s32.totalorder %s26, 0
      %p46 = por %p44, %p45
      %p47 = scmp.ne.s32.totalorder %s36, %s39
      %p48 = scmp.eq.s32.totalorder %s31, 1
      %p49 = por %p47, %p48
      %p50 = scmp.ne.s32.totalorder %s39, %s40
      %p51 = scmp.eq.s32.totalorder %s31, 0
      %p52 = por %p50, %p51
      %p53 = scmp.ne.s32.totalorder %s39, %s40
      %p54 = scmp.eq.s32.totalorder %s32, 1
      %p55 = por %p53, %p54
      %p57 = scmp.ne.s32.totalorder %s40, %s56
      %p58 = scmp.eq.s32.totalorder %s32, 0
      %p59 = por %p57, %p58
      %s61 = sadd.s32 %s60, 1
      %p64 = scmp.eq.s32.totalorder %s26, 1
      %p65 = scmp.ne.s32.totalorder %s60, %s62
      %p66 = scmp.eq.s32.totalorder %s26, 0
      %p67 = por %p65, %p66
      %p68 = scmp.ne.s32.totalorder %s60, %s62
      %p69 = scmp.eq.s32.totalorder %s31, 1
      %p70 = por %p68, %p69
      %p71 = scmp.ne.s32.totalorder %s62, %s63
      %p72 = scmp.eq.s32.totalorder %s31, 0
      %p73 = por %p71, %p72
      %p74 = scmp.ne.s32.totalorder %s62, %s63
      %p75 = scmp.eq.s32.totalorder %s32, 1
      %p76 = por %p74, %p75
      %p78 = scmp.ne.s32.totalorder %s63, %s77
      %p79 = scmp.eq.s32.totalorder %s32, 0
      %p80 = por %p78, %p79
      %s82 = sadd.s32 %s81, 1
      %p85 = scmp.eq.s32.totalorder %s26, 1
      %p86 = scmp.ne.s32.totalorder %s81, %s83
      %p87 = scmp.eq.s32.totalorder %s26, 0
      %p88 = por %p86, %p87
      %p89 = scmp.ne.s32.totalorder %s81, %s83
      %p90 = scmp.eq.s32.totalorder %s31, 1
      %p91 = por %p89, %p90
      %p92 = scmp.ne.s32.totalorder %s83, %s84
      %p93 = scmp.eq.s32.totalorder %s31, 0
      %p94 = por %p92, %p93
      %p95 = scmp.ne.s32.totalorder %s83, %s84
      %p96 = scmp.eq.s32.totalorder %s32, 1
      %p97 = por %p95, %p96
      %p99 = scmp.ne.s32.totalorder %s84, %s98
      %p100 = scmp.eq.s32.totalorder %s32, 0
      %p101 = por %p99, %p100
      %s103 = sadd.s32 %s102, 1
      %p106 = scmp.eq.s32.totalorder %s26, 1
      %p107 = scmp.ne.s32.totalorder %s102, %s104
      %p108 = scmp.eq.s32.totalorder %s26, 0
      %p109 = por %p107, %p108
      %p110 = scmp.ne.s32.totalorder %s102, %s104
      %p111 = scmp.eq.s32.totalorder %s31, 1
      %p112 = por %p110, %p111
      %p113 = scmp.ne.s32.totalorder %s104, %s105
      %p114 = scmp.eq.s32.totalorder %s31, 0
      %p115 = por %p113, %p114
      %p116 = scmp.ne.s32.totalorder %s104, %s105
      %p117 = scmp.eq.s32.totalorder %s32, 1
      %p118 = por %p116, %p117
      %p120 = scmp.ne.s32.totalorder %s105, %s119
      %p121 = scmp.eq.s32.totalorder %s32, 0
      %p122 = por %p120, %p121
      %s124 = sadd.s32 %s123, 1
      %p127 = scmp.eq.s32.totalorder %s26, 1
      %p128 = scmp.ne.s32.totalorder %s123, %s125
      %p129 = scmp.eq.s32.totalorder %s26, 0
      %p130 = por %p128, %p129
      %p131 = scmp.ne.s32.totalorder %s123, %s125
      %p132 = scmp.eq.s32.totalorder %s31, 1
      %p133 = por %p131, %p132
      %p134 = scmp.ne.s32.totalorder %s125, %s126
      %p135 = scmp.eq.s32.totalorder %s31, 0
      %p136 = por %p134, %p135
      %p137 = scmp.ne.s32.totalorder %s125, %s126
      %p138 = scmp.eq.s32.totalorder %s32, 1
      %p139 = por %p137, %p138
      %p141 = scmp.ne.s32.totalorder %s126, %s140
      %p142 = scmp.eq.s32.totalorder %s32, 0
      %p143 = por %p141, %p142
      %s145 = sadd.s32 %s144, 1
      %p148 = scmp.eq.s32.totalorder %s26, 1
      %p149 = scmp.ne.s32.totalorder %s144, %s146
      %p150 = scmp.eq.s32.totalorder %s26, 0
      %p151 = por %p149, %p150
      %p152 = scmp.ne.s32.totalorder %s144, %s146
      %p153 = scmp.eq.s32.totalorder %s31, 1
      %p154 = por %p152, %p153
      %p155 = scmp.ne.s32.totalorder %s146, %s147
      %p156 = scmp.eq.s32.totalorder %s31, 0
      %p157 = por %p155, %p156
      %p158 = scmp.ne.s32.totalorder %s146, %s147
      %p159 = scmp.eq.s32.totalorder %s32, 1
      %p160 = por %p158, %p159
      %p162 = scmp.ne.s32.totalorder %s147, %s161
      %p163 = scmp.eq.s32.totalorder %s32, 0
      %p164 = por %p162, %p163
      %s166 = sadd.s32 %s165, 1
      %p169 = scmp.eq.s32.totalorder %s26, 1
      %p170 = scmp.ne.s32.totalorder %s165, %s167
      %p171 = scmp.eq.s32.totalorder %s26, 0
      %p172 = por %p170, %p171
      %p173 = scmp.ne.s32.totalorder %s165, %s167
      %p174 = scmp.eq.s32.totalorder %s31, 1
      %p175 = por %p173, %p174
      %p176 = scmp.ne.s32.totalorder %s167, %s168
      %p177 = scmp.eq.s32.totalorder %s31, 0
      %p178 = por %p176, %p177
      %p179 = scmp.ne.s32.totalorder %s167, %s168
      %p180 = scmp.eq.s32.totalorder %s32, 1
      %p181 = por %p179, %p180
      %p183 = scmp.ne.s32.totalorder %s168, %s182
      %p184 = scmp.eq.s32.totalorder %s32, 0
      %p185 = por %p183, %p184
      %s187 = sadd.s32 %s186, 1
      %p190 = scmp.eq.s32.totalorder %s26, 1
      %p191 = scmp.ne.s32.totalorder %s186, %s188
      %p192 = scmp.eq.s32.totalorder %s26, 0
      %p193 = por %p191, %p192
      %p194 = scmp.ne.s32.totalorder %s186, %s188
      %p195 = scmp.eq.s32.totalorder %s31, 1
      %p196 = por %p194, %p195
      %p197 = scmp.ne.s32.totalorder %s188, %s189
      %p198 = scmp.eq.s32.totalorder %s31, 0
      %p199 = por %p197, %p198
      %p200 = scmp.ne.s32.totalorder %s188, %s189
      %p201 = scmp.eq.s32.totalorder %s32, 1
      %p202 = por %p200, %p201
      %p204 = scmp.ne.s32.totalorder %s189, %s203
      %p205 = scmp.eq.s32.totalorder %s32, 0
      %p206 = por %p204, %p205
      %s208 = sadd.s32 %s207, 1
      %p211 = scmp.eq.s32.totalorder %s26, 1
      %p212 = scmp.ne.s32.totalorder %s207, %s209
      %p213 = scmp.eq.s32.totalorder %s26, 0
      %p214 = por %p212, %p213
      %p215 = scmp.ne.s32.totalorder %s207, %s209
      %p216 = scmp.eq.s32.totalorder %s31, 1
      %p217 = por %p215, %p216
      %p218 = scmp.ne.s32.totalorder %s209, %s210
      %p219 = scmp.eq.s32.totalorder %s31, 0
      %p220 = por %p218, %p219
      %p221 = scmp.ne.s32.totalorder %s209, %s210
      %p222 = scmp.eq.s32.totalorder %s32, 1
      %p223 = por %p221, %p222
      %p225 = scmp.ne.s32.totalorder %s210, %s224
      %p226 = scmp.eq.s32.totalorder %s32, 0
      %p227 = por %p225, %p226
      %s229 = sadd.s32 %s228, 1
      %p232 = scmp.eq.s32.totalorder %s26, 1
      %p233 = scmp.ne.s32.totalorder %s228, %s230
      %p234 = scmp.eq.s32.totalorder %s26, 0
      %p235 = por %p233, %p234
      %p236 = scmp.ne.s32.totalorder %s228, %s230
      %p237 = scmp.eq.s32.totalorder %s31, 1
      %p238 = por %p236, %p237
      %p239 = scmp.ne.s32.totalorder %s230, %s231
      %p240 = scmp.eq.s32.totalorder %s31, 0
      %p241 = por %p239, %p240
      %p242 = scmp.ne.s32.totalorder %s230, %s231
      %p243 = scmp.eq.s32.totalorder %s32, 1
      %p244 = por %p242, %p243
      %p246 = scmp.ne.s32.totalorder %s231, %s245
      %p247 = scmp.eq.s32.totalorder %s32, 0
      %p248 = por %p246, %p247
      %s250 = sadd.s32 %s249, 1
      %p253 = scmp.eq.s32.totalorder %s26, 1
      %p254 = scmp.ne.s32.totalorder %s249, %s251
      %p255 = scmp.eq.s32.totalorder %s26, 0
      %p256 = por %p254, %p255
      %p257 = scmp.ne.s32.totalorder %s249, %s251
      %p258 = scmp.eq.s32.totalorder %s31, 1
      %p259 = por %p257, %p258
      %p260 = scmp.ne.s32.totalorder %s251, %s252
      %p261 = scmp.eq.s32.totalorder %s31, 0
      %p262 = por %p260, %p261
      %p263 = scmp.ne.s32.totalorder %s251, %s252
      %p264 = scmp.eq.s32.totalorder %s32, 1
      %p265 = por %p263, %p264
      %p267 = scmp.ne.s32.totalorder %s252, %s266
      %p268 = scmp.eq.s32.totalorder %s32, 0
      %p269 = por %p267, %p268
      %s271 = sadd.s32 %s270, 1
      %p274 = scmp.eq.s32.totalorder %s26, 1
      %p275 = scmp.ne.s32.totalorder %s270, %s272
      %p276 = scmp.eq.s32.totalorder %s26, 0
      %p277 = por %p275, %p276
      %p278 = scmp.ne.s32.totalorder %s270, %s272
      %p279 = scmp.eq.s32.totalorder %s31, 1
      %p280 = por %p278, %p279
      %p281 = scmp.ne.s32.totalorder %s272, %s273
      %p282 = scmp.eq.s32.totalorder %s31, 0
      %p283 = por %p281, %p282
      %p284 = scmp.ne.s32.totalorder %s272, %s273
      %p285 = scmp.eq.s32.totalorder %s32, 1
      %p286 = por %p284, %p285
      %p288 = scmp.ne.s32.totalorder %s273, %s287
      %p289 = scmp.eq.s32.totalorder %s32, 0
      %p290 = por %p288, %p289
      %s292 = sadd.s32 %s291, 1
      %p295 = scmp.eq.s32.totalorder %s26, 1
      %p296 = scmp.ne.s32.totalorder %s291, %s293
      %p297 = scmp.eq.s32.totalorder %s26, 0
      %p298 = por %p296, %p297
      %p299 = scmp.ne.s32.totalorder %s291, %s293
      %p300 = scmp.eq.s32.totalorder %s31, 1
      %p301 = por %p299, %p300
      %p302 = scmp.ne.s32.totalorder %s293, %s294
      %p303 = scmp.eq.s32.totalorder %s31, 0
      %p304 = por %p302, %p303
      %p305 = scmp.ne.s32.totalorder %s293, %s294
      %p306 = scmp.eq.s32.totalorder %s32, 1
      %p307 = por %p305, %p306
      %p309 = scmp.ne.s32.totalorder %s294, %s308
      %p310 = scmp.eq.s32.totalorder %s32, 0
      %p311 = por %p309, %p310
      %s313 = sadd.s32 %s312, 1
      %p316 = scmp.eq.s32.totalorder %s26, 1
      %p317 = scmp.ne.s32.totalorder %s312, %s314
      %p318 = scmp.eq.s32.totalorder %s26, 0
      %p319 = por %p317, %p318
      %p320 = scmp.ne.s32.totalorder %s312, %s314
      %p321 = scmp.eq.s32.totalorder %s31, 1
      %p322 = por %p320, %p321
      %p323 = scmp.ne.s32.totalorder %s314, %s315
      %p324 = scmp.eq.s32.totalorder %s31, 0
      %p325 = por %p323, %p324
      %p326 = scmp.ne.s32.totalorder %s314, %s315
      %p327 = scmp.eq.s32.totalorder %s32, 1
      %p328 = por %p326, %p327
      %p330 = scmp.ne.s32.totalorder %s315, %s329
      %p331 = scmp.eq.s32.totalorder %s32, 0
      %p332 = por %p330, %p331
      %s334 = sadd.s32 %s333, 1
      %p337 = scmp.eq.s32.totalorder %s26, 1
      %p338 = scmp.ne.s32.totalorder %s333, %s335
      %p339 = scmp.eq.s32.totalorder %s26, 0
      %p340 = por %p338, %p339
      %p341 = scmp.ne.s32.totalorder %s333, %s335
      %p342 = scmp.eq.s32.totalorder %s31, 1
      %p343 = por %p341, %p342
      %p344 = scmp.ne.s32.totalorder %s335, %s336
      %p345 = scmp.eq.s32.totalorder %s31, 0
      %p346 = por %p344, %p345
      %p347 = scmp.ne.s32.totalorder %s335, %s336
      %p348 = scmp.eq.s32.totalorder %s32, 1
      %p349 = por %p347, %p348
      %p351 = scmp.ne.s32.totalorder %s336, %s350
      %p352 = scmp.eq.s32.totalorder %s32, 0
      %p353 = por %p351, %p352
      %s355 = sadd.s32 %s354, 1
      %p358 = scmp.eq.s32.totalorder %s26, 1
      %p359 = scmp.ne.s32.totalorder %s354, %s356
      %p360 = scmp.eq.s32.totalorder %s26, 0
      %p361 = por %p359, %p360
      %p362 = scmp.ne.s32.totalorder %s354, %s356
      %p363 = scmp.eq.s32.totalorder %s31, 1
      %p364 = por %p362, %p363
      %p365 = scmp.ne.s32.totalorder %s356, %s357
      %p366 = scmp.eq.s32.totalorder %s31, 0
      %p367 = por %p365, %p366
      %p368 = scmp.ne.s32.totalorder %s356, %s357
      %p369 = scmp.eq.s32.totalorder %s32, 1
      %p370 = por %p368, %p369
      %p372 = scmp.ne.s32.totalorder %s357, %s371
      %p373 = scmp.eq.s32.totalorder %s32, 0
      %p374 = por %p372, %p373
      %s376 = sadd.s32 %s375, 1
      %p379 = scmp.eq.s32.totalorder %s26, 1
      %p380 = scmp.ne.s32.totalorder %s375, %s377
      %p381 = scmp.eq.s32.totalorder %s26, 0
      %p382 = por %p380, %p381
      %p383 = scmp.ne.s32.totalorder %s375, %s377
      %p384 = scmp.eq.s32.totalorder %s31, 1
      %p385 = por %p383, %p384
      %p386 = scmp.ne.s32.totalorder %s377, %s378
      %p387 = scmp.eq.s32.totalorder %s31, 0
      %p388 = por %p386, %p387
      %p389 = scmp.ne.s32.totalorder %s377, %s378
      %p390 = scmp.eq.s32.totalorder %s32, 1
      %p391 = por %p389, %p390
      %p393 = scmp.ne.s32.totalorder %s378, %s392
      %p394 = scmp.eq.s32.totalorder %s32, 0
      %p395 = por %p393, %p394
      %s396 = ssub.s32 %s26, %s33
      %p397 = scmp.eq.s32.totalorder %s396, 0
      %s399 = sadd.s32 %s398, 1
      %s400 = scalar_select %p397, %s398, %s399
      %p403 = pneg %p397
      %p404 = scmp.eq.s32.totalorder %s26, 1
      %p405 = por %p403, %p404
      %p406 = scmp.ne.s32.totalorder %s398, %s401
      %p407 = scmp.eq.s32.totalorder %s26, 0
      %p408 = por %p406, %p407
      %p409 = scmp.ne.s32.totalorder %s398, %s401
      %p410 = scmp.eq.s32.totalorder %s31, 1
      %p411 = por %p409, %p410
      %p412 = scmp.ne.s32.totalorder %s401, %s402
      %p413 = scmp.eq.s32.totalorder %s31, 0
      %p414 = por %p412, %p413
      %p415 = scmp.ne.s32.totalorder %s401, %s402
      %p416 = scmp.eq.s32.totalorder %s32, 1
      %p417 = por %p415, %p416
      %p419 = scmp.ne.s32.totalorder %s402, %s418
      %p420 = scmp.eq.s32.totalorder %s32, 0
      %p421 = por %p419, %p420
      %p422 = scmp.le.s32.totalorder 1, %s26
      %p423 = scmp.lt.s32.totalorder %s26, 3
      %p424 = pnand %p422, %p423
      %p425 = pneg %p424
      // Predicated region
      $region9: #{tpu_custom_call.1} parent=5 // pred_check
        _
      $region10: #{tpu_custom_call.1} parent=5 // pred_check_branch
        %427 = sbr.rel (%p424) target = $region12
      $region11: #{tpu_custom_call.1} parent=5 // pred_region
        %s428 = ssub.s32 %s26, 1
        // Predicated region
        $region13: #{tpu_custom_call.1} parent=11 // pred_check
          %p429 = pneg %p73
        $region14: #{tpu_custom_call.1} parent=11 // pred_check_branch
          %431 = sbr.rel (%p429) target = $region16
        $region15: #{tpu_custom_call.1} parent=11 // pred_region
          _
        $region16: #{tpu_custom_call.1} parent=11 // pred_fallthru
          _
        // Predicated region
        $region17: #{tpu_custom_call.1} parent=11 // pred_check
          %p432 = pneg %p94
        $region18: #{tpu_custom_call.1} parent=11 // pred_check_branch
          %434 = sbr.rel (%p432) target = $region20
        $region19: #{tpu_custom_call.1} parent=11 // pred_region
          _
        $region20: #{tpu_custom_call.1} parent=11 // pred_fallthru
          _
        // Predicated region
        $region21: #{tpu_custom_call.1} parent=11 // pred_check
          %p435 = pneg %p115
        $region22: #{tpu_custom_call.1} parent=11 // pred_check_branch
          %437 = sbr.rel (%p435) target = $region24
        $region23: #{tpu_custom_call.1} parent=11 // pred_region
          _
        $region24: #{tpu_custom_call.1} parent=11 // pred_fallthru
          _
        // Predicated region
        $region25: #{tpu_custom_call.1} parent=11 // pred_check
          %p438 = pneg %p136
        $region26: #{tpu_custom_call.1} parent=11 // pred_check_branch
          %440 = sbr.rel (%p438) target = $region28
        $region27: #{tpu_custom_call.1} parent=11 // pred_region
          _
        $region28: #{tpu_custom_call.1} parent=11 // pred_fallthru
          _
        // Predicated region
        $region29: #{tpu_custom_call.1} parent=11 // pred_check
          %p441 = pneg %p157
        $region30: #{tpu_custom_call.1} parent=11 // pred_check_branch
          %443 = sbr.rel (%p441) target = $region32
        $region31: #{tpu_custom_call.1} parent=11 // pred_region
          _
        $region32: #{tpu_custom_call.1} parent=11 // pred_fallthru
          _
        // Predicated region
        $region33: #{tpu_custom_call.1} parent=11 // pred_check
          %p444 = pneg %p178
        $region34: #{tpu_custom_call.1} parent=11 // pred_check_branch
          %446 = sbr.rel (%p444) target = $region36
        $region35: #{tpu_custom_call.1} parent=11 // pred_region
          _
        $region36: #{tpu_custom_call.1} parent=11 // pred_fallthru
          _
        // Predicated region
        $region37: #{tpu_custom_call.1} parent=11 // pred_check
          %p447 = pneg %p199
        $region38: #{tpu_custom_call.1} parent=11 // pred_check_branch
          %449 = sbr.rel (%p447) target = $region40
        $region39: #{tpu_custom_call.1} parent=11 // pred_region
          _
        $region40: #{tpu_custom_call.1} parent=11 // pred_fallthru
          _
        // Predicated region
        $region41: #{tpu_custom_call.1} parent=11 // pred_check
          %p450 = pneg %p220
        $region42: #{tpu_custom_call.1} parent=11 // pred_check_branch
          %452 = sbr.rel (%p450) target = $region44
        $region43: #{tpu_custom_call.1} parent=11 // pred_region
          _
        $region44: #{tpu_custom_call.1} parent=11 // pred_fallthru
          _
        // Predicated region
        $region45: #{tpu_custom_call.1} parent=11 // pred_check
          %p453 = pneg %p241
        $region46: #{tpu_custom_call.1} parent=11 // pred_check_branch
          %455 = sbr.rel (%p453) target = $region48
        $region47: #{tpu_custom_call.1} parent=11 // pred_region
          _
        $region48: #{tpu_custom_call.1} parent=11 // pred_fallthru
          _
        // Predicated region
        $region49: #{tpu_custom_call.1} parent=11 // pred_check
          %p456 = pneg %p262
        $region50: #{tpu_custom_call.1} parent=11 // pred_check_branch
          %458 = sbr.rel (%p456) target = $region52
        $region51: #{tpu_custom_call.1} parent=11 // pred_region
          _
        $region52: #{tpu_custom_call.1} parent=11 // pred_fallthru
          _
        // Predicated region
        $region53: #{tpu_custom_call.1} parent=11 // pred_check
          %p459 = pneg %p283
        $region54: #{tpu_custom_call.1} parent=11 // pred_check_branch
          %461 = sbr.rel (%p459) target = $region56
        $region55: #{tpu_custom_call.1} parent=11 // pred_region
          _
        $region56: #{tpu_custom_call.1} parent=11 // pred_fallthru
          _
        // Predicated region
        $region57: #{tpu_custom_call.1} parent=11 // pred_check
          %p462 = pneg %p304
        $region58: #{tpu_custom_call.1} parent=11 // pred_check_branch
          %464 = sbr.rel (%p462) target = $region60
        $region59: #{tpu_custom_call.1} parent=11 // pred_region
          _
        $region60: #{tpu_custom_call.1} parent=11 // pred_fallthru
          _
        // Predicated region
        $region61: #{tpu_custom_call.1} parent=11 // pred_check
          %p465 = pneg %p325
        $region62: #{tpu_custom_call.1} parent=11 // pred_check_branch
          %467 = sbr.rel (%p465) target = $region64
        $region63: #{tpu_custom_call.1} parent=11 // pred_region
          _
        $region64: #{tpu_custom_call.1} parent=11 // pred_fallthru
          _
        // Predicated region
        $region65: #{tpu_custom_call.1} parent=11 // pred_check
          %p468 = pneg %p346
        $region66: #{tpu_custom_call.1} parent=11 // pred_check_branch
          %470 = sbr.rel (%p468) target = $region68
        $region67: #{tpu_custom_call.1} parent=11 // pred_region
          _
        $region68: #{tpu_custom_call.1} parent=11 // pred_fallthru
          _
        // Predicated region
        $region69: #{tpu_custom_call.1} parent=11 // pred_check
          %p471 = pneg %p367
        $region70: #{tpu_custom_call.1} parent=11 // pred_check_branch
          %473 = sbr.rel (%p471) target = $region72
        $region71: #{tpu_custom_call.1} parent=11 // pred_region
          _
        $region72: #{tpu_custom_call.1} parent=11 // pred_fallthru
          _
        // Predicated region
        $region73: #{tpu_custom_call.1} parent=11 // pred_check
          %p474 = pneg %p388
        $region74: #{tpu_custom_call.1} parent=11 // pred_check_branch
          %476 = sbr.rel (%p474) target = $region76
        $region75: #{tpu_custom_call.1} parent=11 // pred_region
          _
        $region76: #{tpu_custom_call.1} parent=11 // pred_fallthru
          _
      $region12: #{tpu_custom_call.1} parent=5 // pred_fallthru
        _
      %p477 = scmp.lt.s32.totalorder %s26, 2
      // Predicated region
      $region77: #{tpu_custom_call.1} parent=5 // pred_check
        %p478 = pneg %p477
      $region78: #{tpu_custom_call.1} parent=5 // pred_check_branch
        %480 = sbr.rel (%p478) target = $region80
      $region79: #{tpu_custom_call.1} parent=5 // pred_region
        // Predicated region
        $region81: #{tpu_custom_call.1} parent=79 // pred_check
          %p481 = pneg %p46
        $region82: #{tpu_custom_call.1} parent=79 // pred_check_branch
          %483 = sbr.rel (%p481) target = $region84
        $region83: #{tpu_custom_call.1} parent=79 // pred_region
          %p484 = scmp.lt.s32.totalorder %s26, 1
          %s485 = scalar_select %p484, %s26, 1
          %s486 = smul.addr %s485, 4
          %s487 = smul.addr %s486, 8
          %s488 = scalar_lea.vmem %s0, %s487
        $region84: #{tpu_custom_call.1} parent=79 // pred_fallthru
          _
      $region80: #{tpu_custom_call.1} parent=5 // pred_fallthru
        _
      %p489 = scmp.le.s32.totalorder 1, %s26
      %p490 = scmp.lt.s32.totalorder %s26, 3
      %p491 = pnand %p489, %p490
      %p492 = pneg %p491
      // Predicated region
      $region85: #{tpu_custom_call.1} parent=5 // pred_check
        _
      $region86: #{tpu_custom_call.1} parent=5 // pred_check_branch
        %494 = sbr.rel (%p491) target = $region88
      $region87: #{tpu_custom_call.1} parent=5 // pred_region
        %s495 = ssub.s32 %s26, 1
        %p496 = scmp.lt.s32.totalorder %s31, 1
        %s497 = scalar_select %p496, %s31, 1
        %s498 = smul.addr %s497, 4
        %s499 = smul.addr %s498, 8
        %s500 = scalar_lea.vmem %s0, %s499
        %p501 = pneg %p52
        %p502 = pneg %p49
        %p503 = pneg %p73
        %p504 = pneg %p70
        %p505 = pneg %p94
        %p506 = pneg %p91
        %p507 = pneg %p115
        %p508 = pneg %p112
        %p509 = pneg %p136
        %p510 = pneg %p133
        %p511 = pneg %p157
        %p512 = pneg %p154
        %p513 = pneg %p178
        %p514 = pneg %p175
        %p515 = pneg %p199
        %p516 = pneg %p196
        %p517 = pneg %p220
        %p518 = pneg %p217
        %p519 = pneg %p241
        %p520 = pneg %p238
        %p521 = pneg %p262
        %p522 = pneg %p259
        %p523 = pneg %p283
        %p524 = pneg %p280
        %p525 = pneg %p304
        %p526 = pneg %p301
        %p527 = pneg %p325
        %p528 = pneg %p322
        %p529 = pneg %p346
        %p530 = pneg %p343
        %p531 = pneg %p367
        %p532 = pneg %p364
        %p533 = pneg %p388
        %p534 = pneg %p385
        %p535 = pneg %p414
        %p536 = pneg %p411
        %s537 = sand.u32 %s401, 1
        %s538 = scalar_lea.sflag [#allocation3], %s537
        %s539 = sand.u32 %s401, 1
        %s540 = smul.addr %s539, 32
        %s541 = scalar_lea.vmem [#allocation2], %s540
        %p542 = scmp.lt.s32.totalorder %s31, 1
        %s543 = scalar_select %p542, %s31, 1
        %s544 = smul.addr %s543, 4
        %s545 = smul.addr %s544, 8
        %s546 = scalar_lea.vmem %s0, %s545
        %v547 = vld [vmem:[%s546] sm:$0xff]
        %v548 = vld [vmem:[%s546 + $0x8] sm:$0xff]
        %v549 = vld [vmem:[%s546 + $0x10] sm:$0xff]
        %v550 = vld [vmem:[%s546 + $0x18] sm:$0xff]
        %v551 = vld [vmem:[%s1] sm:$0xff]
        %vm552 = vcmask 130048
        %v554 = vsel %vm552, %v551, 0
        %556 = vmatpush.msra.mxu0 0.0
        %557 = vmatpush.msra.mxu0 0.0
        %558 = vmatpush.msra.mxu0 0.0
        %559 = vmatpush.msra.mxu0 0.0
        %560 = vmatpush.msra.mxu0 0.0
        %561 = vmatpush.msra.mxu0 0.0
        %562 = vmatpush.msra.mxu0 0.0
        %563 = vmatpush.msra.mxu0 0.0
        %564 = vmatpush.msra.mxu0 0.0
        %565 = vmatpush.msra.mxu0 0.0
        %566 = vmatpush.msra.mxu0 0.0
        %567 = vmatpush.msra.mxu0 0.0
        %568 = vmatpush.msra.mxu0 0.0
        %569 = vmatpush.msra.mxu0 0.0
        %570 = vmatpush.msra.mxu0 %v549
        %571 = vmatpush.msra.mxu0 %v547
        %572 = vmatmul.f32.gmra.mxu0 %v554
        %v573 = vpop.f32.mrf.mxu0
        %v574 = vadd.f32 0.0, %v573
        %575 = vdwg.mxu0
        %576 = vmatpush.msra.mxu0 0.0
        %577 = vmatpush.msra.mxu0 0.0
        %578 = vmatpush.msra.mxu0 0.0
        %579 = vmatpush.msra.mxu0 0.0
        %580 = vmatpush.msra.mxu0 0.0
        %581 = vmatpush.msra.mxu0 0.0
        %582 = vmatpush.msra.mxu0 0.0
        %583 = vmatpush.msra.mxu0 0.0
        %584 = vmatpush.msra.mxu0 0.0
        %585 = vmatpush.msra.mxu0 0.0
        %586 = vmatpush.msra.mxu0 0.0
        %587 = vmatpush.msra.mxu0 0.0
        %588 = vmatpush.msra.mxu0 0.0
        %589 = vmatpush.msra.mxu0 0.0
        %590 = vmatpush.msra.mxu0 %v550
        %591 = vmatpush.msra.mxu0 %v548
        %592 = vmatmul.f32.gmra.mxu0 %v554
        %v593 = vpop.f32.mrf.mxu0
        %v594 = vadd.f32 0.0, %v593
        %595 = vdwg.mxu0
        %v596 = vld [vmem:[%s2] sm:$0xff]
        %598 = vset.pattern.permute.xlu0 0
        %599 = vperm.xlu0 %598, %v596
        %v600 = vpop.permute.xlu0 %599
        %v602 = vmul.f32 %v574, %v600
        %v603 = vmul.f32 %v594, %v600
        %v604 = vld [vmem:[%s3] sm:$0xff]
        %606 = vset.pattern.permute.xlu0 0
        %607 = vperm.xlu0 %606, %v604
        %v608 = vpop.permute.xlu0 %607
        %v610 = vadd.f32 %v602, %v608
        %v611 = vadd.f32 %v603, %v608
        %v612 = vxor.u32 %v610, 2147483648
        %v613 = vxor.u32 %v611, 2147483648
        %v614 = vmul.f32 %v612, 1.442695
        %v615 = vpow.pop %v614
        %v616 = vmul.f32 %v613, 1.442695
        %v617 = vpow.pop %v616
        %v618 = vadd.f32 %v615, 1.0
        %v619 = vadd.f32 %v617, 1.0
        %v620 = vrcp.pop %v618
        %v621 = vmul.f32 %v618, %v620
        %v622 = vsub.f32 1.0, %v621
        %v623 = vmul.f32 %v620, %v622
        %v624 = vadd.f32 %v620, %v623
        %vm625 = vweird.f32 %v618
        %vm626 = vweird.f32 %v620
        %vm627 = vmor %vm625, %vm626
        %v628 = vsel %vm627, %v620, %v624
        %v629 = vand.u32 2147483647, %v618
        %vm630 = vcmp.eq.f32.partialorder %v629, 8.507059e+37
        %v631 = vand.u32 %v618, 2147483648
        %v632 = vor.u32 1.1754944e-38, %v631
        %v633 = vsel %vm630, %v632, %v628
        %v634 = vmul.f32 1.0, %v633
        %v635 = vrcp.pop %v619
        %v636 = vmul.f32 %v619, %v635
        %v637 = vsub.f32 1.0, %v636
        %v638 = vmul.f32 %v635, %v637
        %v639 = vadd.f32 %v635, %v638
        %vm640 = vweird.f32 %v619
        %vm641 = vweird.f32 %v635
        %vm642 = vmor %vm640, %vm641
        %v643 = vsel %vm642, %v635, %v639
        %v644 = vand.u32 2147483647, %v619
        %vm645 = vcmp.eq.f32.partialorder %v644, 8.507059e+37
        %v646 = vand.u32 %v619, 2147483648
        %v647 = vor.u32 1.1754944e-38, %v646
        %v648 = vsel %vm645, %v647, %v643
        %v649 = vmul.f32 1.0, %v648
        %v650 = vmul.f32 %v610, %v634
        %v651 = vmul.f32 %v611, %v649
        %654 = vrot.lane.b32.xlu0 %v650, 17
        %v655 = vpop.permute.xlu0 %654
        %656 = vrot.lane.b32.xlu0 %v651, 17
        %v657 = vpop.permute.xlu0 %656
        %vm658 = vcmask 138240
        %v659 = vsel %vm658, %v655, %v657
        %v663 = vsel %vm658, 0.0, %v655
        %v664 = vsel %vm658, %v657, 0.0
        %v665 = vlaneseq
        %v666 = vand.u32 %v665, 127
        %v667 = vadd.s32 %v666, 128
        %vm668 = vcmp.lt.s32.totalorder %v666, 0
        %v669 = vsub.s32 0, %v666
        %v670 = vsel %vm668, %v669, %v666
        %v671 = vshrl.u32 %v670, 4
        %v672 = vand.u32 %v670, 15
        %v673 = vsub.s32 0, %v672
        %v674 = vsel %vm668, %v673, %v672
        %vm675 = vcmp.lt.s32.totalorder %v667, 0
        %v676 = vsub.s32 0, %v667
        %v677 = vsel %vm675, %v676, %v667
        %v678 = vshrl.u32 %v677, 4
        %v679 = vand.u32 %v677, 15
        %v680 = vsub.s32 0, %v679
        %v681 = vsel %vm675, %v680, %v679
        %vm682 = vcmp.ne.s32.totalorder %v674, 0
        %vm683 = vcmp.ne.s32.totalorder %v681, 0
        %vm684 = vcmp.lt.s32.totalorder %v674, 0
        %vm685 = vcmp.lt.s32.totalorder %v681, 0
        %vm686 = vmand %vm684, %vm682
        %vm687 = vmand %vm685, %vm683
        %v688 = vadd.s32 %v674, 16
        %v689 = vadd.s32 %v681, 16
        %v690 = vsel %vm686, %v688, %v674
        %v691 = vsel %vm687, %v689, %v681
        %vm692 = vcmp.ge.s32.totalorder %v690, 1
        %vm693 = vcmp.ge.s32.totalorder %v691, 1
        %v694 = vsel %vm692, 1, 0
        %v695 = vsel %vm693, 1, 0
        %v696 = vcvt.s32.f32 %v694
        %v697 = vcvt.s32.f32 %v695
        %vm698 = vcmp.le.s32.totalorder %v690, 14
        %vm699 = vcmp.le.s32.totalorder %v691, 14
        %v700 = vsel %vm698, 1, 0
        %v701 = vsel %vm699, 1, 0
        %v702 = vcvt.s32.f32 %v700
        %v703 = vcvt.s32.f32 %v701
        %v704 = vmul.f32 %v663, %v696
        %v705 = vmul.f32 %v659, %v697
        %708 = vrot.lane.b32.xlu0 %v702, 2
        %v709 = vpop.permute.xlu0 %708
        %710 = vrot.lane.b32.xlu0 %v703, 2
        %v711 = vpop.permute.xlu0 %710
        %vm712 = vcmask 15360
        %v713 = vsel %vm712, %v709, %v711
        %v717 = vmul.f32 %v663, %v709
        %v718 = vmul.f32 %v659, %v713
        %v719 = vmul.f32 %v664, %v711
        %722 = vrot.lane.b32.xlu0 %v696, 16
        %v723 = vpop.permute.xlu0 %722
        %724 = vrot.lane.b32.xlu0 %v697, 16
        %v725 = vpop.permute.xlu0 %724
        %v726 = vsel %vm552, %v723, %v725
        %v730 = vmul.f32 %v663, %v723
        %v731 = vmul.f32 %v659, %v726
        %v732 = vmul.f32 %v664, %v725
        %733 = vrot.lane.b32.xlu0 %v702, 18
        %v734 = vpop.permute.xlu0 %733
        %735 = vrot.lane.b32.xlu0 %v703, 18
        %v736 = vpop.permute.xlu0 %735
        %vm737 = vcmask 146432
        %v738 = vsel %vm737, %v734, %v736
        %v742 = vmul.f32 %v663, %v734
        %v743 = vmul.f32 %v659, %v738
        %v744 = vmul.f32 %v664, %v736
        %745 = vrot.lane.b32.xlu0 %v696, 32
        %v746 = vpop.permute.xlu0 %745
        %747 = vrot.lane.b32.xlu0 %v697, 32
        %v748 = vpop.permute.xlu0 %747
        %vm749 = vcmask 261120
        %v750 = vsel %vm749, %v746, %v748
        %v754 = vmul.f32 %v663, %v746
        %v755 = vmul.f32 %v659, %v750
        %v756 = vmul.f32 %v664, %v748
        %757 = vrot.lane.b32.xlu0 %v702, 34
        %v758 = vpop.permute.xlu0 %757
        %759 = vrot.lane.b32.xlu0 %v703, 34
        %v760 = vpop.permute.xlu0 %759
        %vm761 = vcmask 277504
        %v762 = vsel %vm761, %v758, %v760
        %v766 = vmul.f32 %v663, %v758
        %v767 = vmul.f32 %v659, %v762
        %v768 = vmul.f32 %v664, %v760
        %771 = vrot.lane.b32.xlu0 %v663, 127
        %v772 = vpop.permute.xlu0 %771
        %773 = vrot.lane.b32.xlu0 %v659, 127
        %v774 = vpop.permute.xlu0 %773
        %775 = vrot.lane.b32.xlu0 %v664, 127
        %v776 = vpop.permute.xlu0 %775
        %vm777 = vcmask 1039360
        %v778 = vsel %vm777, %v772, %v774
        %v779 = vsel %vm777, %v774, %v776
        %785 = vrot.lane.b32.xlu0 %v717, 126
        %v786 = vpop.permute.xlu0 %785
        %787 = vrot.lane.b32.xlu0 %v718, 126
        %v788 = vpop.permute.xlu0 %787
        %789 = vrot.lane.b32.xlu0 %v719, 126
        %v790 = vpop.permute.xlu0 %789
        %vm791 = vcmask 1031168
        %v792 = vsel %vm791, %v786, %v788
        %v793 = vsel %vm791, %v788, %v790
        %799 = vrot.lane.b32.xlu0 %v730, 112
        %v800 = vpop.permute.xlu0 %799
        %801 = vrot.lane.b32.xlu0 %v731, 112
        %v802 = vpop.permute.xlu0 %801
        %803 = vrot.lane.b32.xlu0 %v732, 112
        %v804 = vpop.permute.xlu0 %803
        %vm805 = vcmask 916480
        %v806 = vsel %vm805, %v800, %v802
        %v807 = vsel %vm805, %v802, %v804
        %810 = vrot.lane.b32.xlu0 %v663, 111
        %v811 = vpop.permute.xlu0 %810
        %812 = vrot.lane.b32.xlu0 %v659, 111
        %v813 = vpop.permute.xlu0 %812
        %814 = vrot.lane.b32.xlu0 %v664, 111
        %v815 = vpop.permute.xlu0 %814
        %vm816 = vcmask 908288
        %v817 = vsel %vm816, %v811, %v813
        %v818 = vsel %vm816, %v813, %v815
        %824 = vrot.lane.b32.xlu0 %v742, 110
        %v825 = vpop.permute.xlu0 %824
        %826 = vrot.lane.b32.xlu0 %v743, 110
        %v827 = vpop.permute.xlu0 %826
        %828 = vrot.lane.b32.xlu0 %v744, 110
        %v829 = vpop.permute.xlu0 %828
        %vm830 = vcmask 900096
        %v831 = vsel %vm830, %v825, %v827
        %v832 = vsel %vm830, %v827, %v829
        %838 = vrot.lane.b32.xlu0 %v754, 96
        %v839 = vpop.permute.xlu0 %838
        %840 = vrot.lane.b32.xlu0 %v755, 96
        %v841 = vpop.permute.xlu0 %840
        %842 = vrot.lane.b32.xlu0 %v756, 96
        %v843 = vpop.permute.xlu0 %842
        %vm844 = vcmask 785408
        %v845 = vsel %vm844, %v839, %v841
        %v846 = vsel %vm844, %v841, %v843
        %849 = vrot.lane.b32.xlu0 %v663, 95
        %v850 = vpop.permute.xlu0 %849
        %851 = vrot.lane.b32.xlu0 %v659, 95
        %v852 = vpop.permute.xlu0 %851
        %853 = vrot.lane.b32.xlu0 %v664, 95
        %v854 = vpop.permute.xlu0 %853
        %vm855 = vcmask 777216
        %v856 = vsel %vm855, %v850, %v852
        %v857 = vsel %vm855, %v852, %v854
        %863 = vrot.lane.b32.xlu0 %v766, 94
        %v864 = vpop.permute.xlu0 %863
        %865 = vrot.lane.b32.xlu0 %v767, 94
        %v866 = vpop.permute.xlu0 %865
        %867 = vrot.lane.b32.xlu0 %v768, 94
        %v868 = vpop.permute.xlu0 %867
        %vm869 = vcmask 769024
        %v870 = vsel %vm869, %v864, %v866
        %v871 = vsel %vm869, %v866, %v868
        %v874 = vld [vmem:[%s4] sm:$0xff]
        %v875 = vld [vmem:[%s4 + $0x8] sm:$0xff]
        %vm876 = vcmask 588800
        %v878 = vsel %vm876, %v874, 0
        %v881 = vsel %vm876, %v875, 0
        %883 = vmatpush.msra.mxu0 0.0
        %884 = vmatpush.msra.mxu0 0.0
        %885 = vmatpush.msra.mxu0 0.0
        %886 = vmatpush.msra.mxu0 0.0
        %887 = vmatpush.msra.mxu0 0.0
        %888 = vmatpush.msra.mxu0 0.0
        %889 = vmatpush.msra.mxu0 0.0
        %890 = vmatpush.msra.mxu0 %v870
        %891 = vmatpush.msra.mxu0 %v856
        %892 = vmatpush.msra.mxu0 %v845
        %893 = vmatpush.msra.mxu0 %v831
        %894 = vmatpush.msra.mxu0 %v817
        %895 = vmatpush.msra.mxu0 %v806
        %896 = vmatpush.msra.mxu0 %v792
        %897 = vmatpush.msra.mxu0 %v778
        %898 = vmatpush.msra.mxu0 %v704
        %899 = vmatmul.f32.gmra.mxu0 %v878
        %v900 = vpop.f32.mrf.mxu0
        %v901 = vadd.f32 0.0, %v900
        %902 = vmatmul.f32.gmra.mxu0 %v881
        %v903 = vpop.f32.mrf.mxu0
        %v904 = vadd.f32 0.0, %v903
        %905 = vdwg.mxu0
        %906 = vmatpush.msra.mxu0 0.0
        %907 = vmatpush.msra.mxu0 0.0
        %908 = vmatpush.msra.mxu0 0.0
        %909 = vmatpush.msra.mxu0 0.0
        %910 = vmatpush.msra.mxu0 0.0
        %911 = vmatpush.msra.mxu0 0.0
        %912 = vmatpush.msra.mxu0 0.0
        %913 = vmatpush.msra.mxu0 %v871
        %914 = vmatpush.msra.mxu0 %v857
        %915 = vmatpush.msra.mxu0 %v846
        %916 = vmatpush.msra.mxu0 %v832
        %917 = vmatpush.msra.mxu0 %v818
        %918 = vmatpush.msra.mxu0 %v807
        %919 = vmatpush.msra.mxu0 %v793
        %920 = vmatpush.msra.mxu0 %v779
        %921 = vmatpush.msra.mxu0 %v705
        %922 = vmatmul.f32.gmra.mxu0 %v878
        %v923 = vpop.f32.mrf.mxu0
        %v924 = vadd.f32 0.0, %v923
        %925 = vmatmul.f32.gmra.mxu0 %v881
        %v926 = vpop.f32.mrf.mxu0
        %v927 = vadd.f32 0.0, %v926
        %928 = vdwg.mxu0
        %v929 = vld [vmem:[%s5] sm:$0xff]
        %v930 = vld [vmem:[%s5 + $0x8] sm:$0xff]
        %932 = vset.pattern.permute.xlu0 0
        %933 = vperm.xlu0 %932, %v929
        %v934 = vpop.permute.xlu0 %933
        %937 = vset.pattern.permute.xlu0 0
        %938 = vperm.xlu0 %937, %v930
        %v939 = vpop.permute.xlu0 %938
        %v941 = vmul.f32 %v901, %v934
        %v942 = vmul.f32 %v924, %v934
        %v943 = vmul.f32 %v904, %v939
        %v944 = vmul.f32 %v927, %v939
        %v945 = vld [vmem:[%s6] sm:$0xff]
        %v946 = vld [vmem:[%s6 + $0x8] sm:$0xff]
        %948 = vset.pattern.permute.xlu0 0
        %949 = vperm.xlu0 %948, %v945
        %v950 = vpop.permute.xlu0 %949
        %953 = vset.pattern.permute.xlu0 0
        %954 = vperm.xlu0 %953, %v946
        %v955 = vpop.permute.xlu0 %954
        %v957 = vadd.f32 %v941, %v950
        %v958 = vadd.f32 %v942, %v950
        %v959 = vadd.f32 %v943, %v955
        %v960 = vadd.f32 %v944, %v955
        %v961 = vxor.u32 %v957, 2147483648
        %v962 = vxor.u32 %v958, 2147483648
        %v963 = vxor.u32 %v959, 2147483648
        %v964 = vxor.u32 %v960, 2147483648
        %v965 = vmul.f32 %v961, 1.442695
        %v966 = vpow.pop %v965
        %v967 = vmul.f32 %v962, 1.442695
        %v968 = vpow.pop %v967
        %v969 = vmul.f32 %v963, 1.442695
        %v970 = vpow.pop %v969
        %v971 = vmul.f32 %v964, 1.442695
        %v972 = vpow.pop %v971
        %v973 = vadd.f32 %v966, 1.0
        %v974 = vadd.f32 %v968, 1.0
        %v975 = vadd.f32 %v970, 1.0
        %v976 = vadd.f32 %v972, 1.0
        %v977 = vrcp.pop %v973
        %v978 = vmul.f32 %v973, %v977
        %v979 = vsub.f32 1.0, %v978
        %v980 = vmul.f32 %v977, %v979
        %v981 = vadd.f32 %v977, %v980
        %vm982 = vweird.f32 %v973
        %vm983 = vweird.f32 %v977
        %vm984 = vmor %vm982, %vm983
        %v985 = vsel %vm984, %v977, %v981
        %v986 = vand.u32 2147483647, %v973
        %vm987 = vcmp.eq.f32.partialorder %v986, 8.507059e+37
        %v988 = vand.u32 %v973, 2147483648
        %v989 = vor.u32 1.1754944e-38, %v988
        %v990 = vsel %vm987, %v989, %v985
        %v991 = vmul.f32 1.0, %v990
        %v992 = vrcp.pop %v974
        %v993 = vmul.f32 %v974, %v992
        %v994 = vsub.f32 1.0, %v993
        %v995 = vmul.f32 %v992, %v994
        %v996 = vadd.f32 %v992, %v995
        %vm997 = vweird.f32 %v974
        %vm998 = vweird.f32 %v992
        %vm999 = vmor %vm997, %vm998
        %v1000 = vsel %vm999, %v992, %v996
        %v1001 = vand.u32 2147483647, %v974
        %vm1002 = vcmp.eq.f32.partialorder %v1001, 8.507059e+37
        %v1003 = vand.u32 %v974, 2147483648
        %v1004 = vor.u32 1.1754944e-38, %v1003
        %v1005 = vsel %vm1002, %v1004, %v1000
        %v1006 = vmul.f32 1.0, %v1005
        %v1007 = vrcp.pop %v975
        %v1008 = vmul.f32 %v975, %v1007
        %v1009 = vsub.f32 1.0, %v1008
        %v1010 = vmul.f32 %v1007, %v1009
        %v1011 = vadd.f32 %v1007, %v1010
        %vm1012 = vweird.f32 %v975
        %vm1013 = vweird.f32 %v1007
        %vm1014 = vmor %vm1012, %vm1013
        %v1015 = vsel %vm1014, %v1007, %v1011
        %v1016 = vand.u32 2147483647, %v975
        %vm1017 = vcmp.eq.f32.partialorder %v1016, 8.507059e+37
        %v1018 = vand.u32 %v975, 2147483648
        %v1019 = vor.u32 1.1754944e-38, %v1018
        %v1020 = vsel %vm1017, %v1019, %v1015
        %v1021 = vmul.f32 1.0, %v1020
        %v1022 = vrcp.pop %v976
        %v1023 = vmul.f32 %v976, %v1022
        %v1024 = vsub.f32 1.0, %v1023
        %v1025 = vmul.f32 %v1022, %v1024
        %v1026 = vadd.f32 %v1022, %v1025
        %vm1027 = vweird.f32 %v976
        %vm1028 = vweird.f32 %v1022
        %vm1029 = vmor %vm1027, %vm1028
        %v1030 = vsel %vm1029, %v1022, %v1026
        %v1031 = vand.u32 2147483647, %v976
        %vm1032 = vcmp.eq.f32.partialorder %v1031, 8.507059e+37
        %v1033 = vand.u32 %v976, 2147483648
        %v1034 = vor.u32 1.1754944e-38, %v1033
        %v1035 = vsel %vm1032, %v1034, %v1030
        %v1036 = vmul.f32 1.0, %v1035
        %v1037 = vmul.f32 %v957, %v991
        %v1038 = vmul.f32 %v958, %v1006
        %v1039 = vmul.f32 %v959, %v1021
        %v1040 = vmul.f32 %v960, %v1036
        %v1041 = vld [vmem:[%s7] sm:$0xff]
        %v1042 = vld [vmem:[%s7 + $0x8] sm:$0xff]
        %v1043 = vld [vmem:[%s7 + $0x10] sm:$0xff]
        %v1044 = vld [vmem:[%s7 + $0x18] sm:$0xff]
        %v1045 = vld [vmem:[%s7 + $0x20] sm:$0xff]
        %v1046 = vld [vmem:[%s7 + $0x28] sm:$0xff]
        %v1047 = vld [vmem:[%s7 + $0x30] sm:$0xff]
        %v1048 = vld [vmem:[%s7 + $0x38] sm:$0xff]
        %v1049 = vld [vmem:[%s7 + $0x40] sm:$0xff]
        %v1050 = vld [vmem:[%s7 + $0x48] sm:$0xff]
        %v1051 = vld [vmem:[%s7 + $0x50] sm:$0xff]
        %v1052 = vld [vmem:[%s7 + $0x58] sm:$0xff]
        %v1053 = vld [vmem:[%s7 + $0x60] sm:$0xff]
        %v1054 = vld [vmem:[%s7 + $0x68] sm:$0xff]
        %v1055 = vld [vmem:[%s7 + $0x70] sm:$0xff]
        %v1056 = vld [vmem:[%s7 + $0x78] sm:$0xff]
        %v1057 = vld [vmem:[%s7 + $0x80] sm:$0xff]
        %v1058 = vld [vmem:[%s7 + $0x88] sm:$0xff]
        %v1059 = vld [vmem:[%s7 + $0x90] sm:$0xff]
        %v1060 = vld [vmem:[%s7 + $0x98] sm:$0xff]
        %v1061 = vld [vmem:[%s7 + $0xa0] sm:$0xff]
        %v1062 = vld [vmem:[%s7 + $0xa8] sm:$0xff]
        %v1063 = vld [vmem:[%s7 + $0xb0] sm:$0xff]
        %v1064 = vld [vmem:[%s7 + $0xb8] sm:$0xff]
        %v1065 = vld [vmem:[%s7 + $0xc0] sm:$0xff]
        %v1066 = vld [vmem:[%s7 + $0xc8] sm:$0xff]
        %v1067 = vld [vmem:[%s7 + $0xd0] sm:$0xff]
        %v1068 = vld [vmem:[%s7 + $0xd8] sm:$0xff]
        %v1069 = vld [vmem:[%s7 + $0xe0] sm:$0xff]
        %v1070 = vld [vmem:[%s7 + $0xe8] sm:$0xff]
        %v1071 = vld [vmem:[%s7 + $0xf0] sm:$0xff]
        %v1072 = vld [vmem:[%s7 + $0xf8] sm:$0xff]
        %1073 = vmatpush.msra.mxu0 %v1056
        %1074 = vmatpush.msra.mxu0 %v1055
        %1075 = vmatpush.msra.mxu0 %v1054
        %1076 = vmatpush.msra.mxu0 %v1053
        %1077 = vmatpush.msra.mxu0 %v1052
        %1078 = vmatpush.msra.mxu0 %v1051
        %1079 = vmatpush.msra.mxu0 %v1050
        %1080 = vmatpush.msra.mxu0 %v1049
        %1081 = vmatpush.msra.mxu0 %v1048
        %1082 = vmatpush.msra.mxu0 %v1047
        %1083 = vmatpush.msra.mxu0 %v1046
        %1084 = vmatpush.msra.mxu0 %v1045
        %1085 = vmatpush.msra.mxu0 %v1044
        %1086 = vmatpush.msra.mxu0 %v1043
        %1087 = vmatpush.msra.mxu0 %v1042
        %1088 = vmatpush.msra.mxu0 %v1041
        %1089 = vmatmul.f32.gmra.mxu0 %v1037
        %v1090 = vpop.f32.mrf.mxu0
        %v1091 = vadd.f32 0.0, %v1090
        %1092 = vmatmul.f32.gmra.mxu0 %v1039
        %v1093 = vpop.f32.mrf.mxu0
        %v1094 = vadd.f32 0.0, %v1093
        %1095 = vdwg.mxu0
        %1096 = vmatpush.msra.mxu0 %v1072
        %1097 = vmatpush.msra.mxu0 %v1071
        %1098 = vmatpush.msra.mxu0 %v1070
        %1099 = vmatpush.msra.mxu0 %v1069
        %1100 = vmatpush.msra.mxu0 %v1068
        %1101 = vmatpush.msra.mxu0 %v1067
        %1102 = vmatpush.msra.mxu0 %v1066
        %1103 = vmatpush.msra.mxu0 %v1065
        %1104 = vmatpush.msra.mxu0 %v1064
        %1105 = vmatpush.msra.mxu0 %v1063
        %1106 = vmatpush.msra.mxu0 %v1062
        %1107 = vmatpush.msra.mxu0 %v1061
        %1108 = vmatpush.msra.mxu0 %v1060
        %1109 = vmatpush.msra.mxu0 %v1059
        %1110 = vmatpush.msra.mxu0 %v1058
        %1111 = vmatpush.msra.mxu0 %v1057
        %1112 = vmatmul.f32.gmra.mxu0 %v1038
        %v1113 = vpop.f32.mrf.mxu0
        %v1114 = vadd.f32 %v1091, %v1113
        %1115 = vmatmul.f32.gmra.mxu0 %v1040
        %v1116 = vpop.f32.mrf.mxu0
        %v1117 = vadd.f32 %v1094, %v1116
        %1118 = vdwg.mxu0
        %v1119 = vld [vmem:[%s8] sm:$0xff]
        %v1121 = vsel %vm552, %v1119, 0
        %1123 = vmatpush.msra.mxu0 0.0
        %1124 = vmatpush.msra.mxu0 0.0
        %1125 = vmatpush.msra.mxu0 0.0
        %1126 = vmatpush.msra.mxu0 0.0
        %1127 = vmatpush.msra.mxu0 0.0
        %1128 = vmatpush.msra.mxu0 0.0
        %1129 = vmatpush.msra.mxu0 0.0
        %1130 = vmatpush.msra.mxu0 0.0
        %1131 = vmatpush.msra.mxu0 0.0
        %1132 = vmatpush.msra.mxu0 0.0
        %1133 = vmatpush.msra.mxu0 0.0
        %1134 = vmatpush.msra.mxu0 0.0
        %1135 = vmatpush.msra.mxu0 0.0
        %1136 = vmatpush.msra.mxu0 0.0
        %1137 = vmatpush.msra.mxu0 %v1117
        %1138 = vmatpush.msra.mxu0 %v1114
        %1139 = vmatmul.f32.gmra.mxu0 %v1121
        %v1140 = vpop.f32.mrf.mxu0
        %v1141 = vadd.f32 0.0, %v1140
        %1142 = vdwg.mxu0
        %v1143 = vld [vmem:[%s9] sm:$0xff]
        %1145 = vset.pattern.permute.xlu0 0
        %1146 = vperm.xlu0 %1145, %v1143
        %v1147 = vpop.permute.xlu0 %1146
        %v1149 = vmul.f32 %v1141, %v1147
        %v1150 = vld [vmem:[%s10] sm:$0xff]
        %1152 = vset.pattern.permute.xlu0 0
        %1153 = vperm.xlu0 %1152, %v1150
        %v1154 = vpop.permute.xlu0 %1153
        %v1156 = vadd.f32 %v1149, %v1154
        %v1157 = vxor.u32 %v1156, 2147483648
        %v1158 = vmul.f32 %v1157, 1.442695
        %v1159 = vpow.pop %v1158
        %v1160 = vadd.f32 %v1159, 1.0
        %v1161 = vrcp.pop %v1160
        %v1162 = vmul.f32 %v1160, %v1161
        %v1163 = vsub.f32 1.0, %v1162
        %v1164 = vmul.f32 %v1161, %v1163
        %v1165 = vadd.f32 %v1161, %v1164
        %vm1166 = vweird.f32 %v1160
        %vm1167 = vweird.f32 %v1161
        %vm1168 = vmor %vm1166, %vm1167
        %v1169 = vsel %vm1168, %v1161, %v1165
        %v1170 = vand.u32 2147483647, %v1160
        %vm1171 = vcmp.eq.f32.partialorder %v1170, 8.507059e+37
        %v1172 = vand.u32 %v1160, 2147483648
        %v1173 = vor.u32 1.1754944e-38, %v1172
        %v1174 = vsel %vm1171, %v1173, %v1169
        %v1175 = vmul.f32 1.0, %v1174
        %v1176 = vmul.f32 %v1156, %v1175
        %v1177 = vld [vmem:[%s11] sm:$0xff]
        %v1178 = vld [vmem:[%s11 + $0x8] sm:$0xff]
        %v1179 = vld [vmem:[%s12] sm:$0xff]
        %v1180 = vld [vmem:[%s12 + $0x8] sm:$0xff]
        %1182 = vset.pattern.permute.xlu0 0
        %1183 = vperm.xlu0 %1182, %v1179
        %v1184 = vpop.permute.xlu0 %1183
        %1187 = vset.pattern.permute.xlu0 0
        %1188 = vperm.xlu0 %1187, %v1180
        %v1189 = vpop.permute.xlu0 %1188
        %vm1191 = vcmask 64512
        %v1193 = vsel %vm1191, %v1177, 0
        %v1196 = vsel %vm1191, %v1178, 0
        %1198 = vmatpush.msra.mxu0 0.0
        %1199 = vmatpush.msra.mxu0 0.0
        %1200 = vmatpush.msra.mxu0 0.0
        %1201 = vmatpush.msra.mxu0 0.0
        %1202 = vmatpush.msra.mxu0 0.0
        %1203 = vmatpush.msra.mxu0 0.0
        %1204 = vmatpush.msra.mxu0 0.0
        %1205 = vmatpush.msra.mxu0 0.0
        %1206 = vmatpush.msra.mxu0 0.0
        %1207 = vmatpush.msra.mxu0 0.0
        %1208 = vmatpush.msra.mxu0 0.0
        %1209 = vmatpush.msra.mxu0 0.0
        %1210 = vmatpush.msra.mxu0 0.0
        %1211 = vmatpush.msra.mxu0 0.0
        %1212 = vmatpush.msra.mxu0 0.0
        %1213 = vmatpush.msra.mxu0 %v1176
        %1214 = vmatmul.f32.gmra.mxu0 %v1193
        %v1215 = vpop.f32.mrf.mxu0
        %v1216 = vadd.f32 %v1184, %v1215
        %1217 = vmatmul.f32.gmra.mxu0 %v1196
        %v1218 = vpop.f32.mrf.mxu0
        %v1219 = vadd.f32 %v1189, %v1218
        %1220 = vdwg.mxu0
        %v1221 = vxor.u32 %v1216, 2147483648
        %v1222 = vxor.u32 %v1219, 2147483648
        %v1223 = vmul.f32 %v1221, 1.442695
        %v1224 = vpow.pop %v1223
        %v1225 = vmul.f32 %v1222, 1.442695
        %v1226 = vpow.pop %v1225
        %v1227 = vadd.f32 %v1224, 1.0
        %v1228 = vadd.f32 %v1226, 1.0
        %v1229 = vrcp.pop %v1227
        %v1230 = vmul.f32 %v1227, %v1229
        %v1231 = vsub.f32 1.0, %v1230
        %v1232 = vmul.f32 %v1229, %v1231
        %v1233 = vadd.f32 %v1229, %v1232
        %vm1234 = vweird.f32 %v1227
        %vm1235 = vweird.f32 %v1229
        %vm1236 = vmor %vm1234, %vm1235
        %v1237 = vsel %vm1236, %v1229, %v1233
        %v1238 = vand.u32 2147483647, %v1227
        %vm1239 = vcmp.eq.f32.partialorder %v1238, 8.507059e+37
        %v1240 = vand.u32 %v1227, 2147483648
        %v1241 = vor.u32 1.1754944e-38, %v1240
        %v1242 = vsel %vm1239, %v1241, %v1237
        %v1243 = vmul.f32 1.0, %v1242
        %v1244 = vrcp.pop %v1228
        %v1245 = vmul.f32 %v1228, %v1244
        %v1246 = vsub.f32 1.0, %v1245
        %v1247 = vmul.f32 %v1244, %v1246
        %v1248 = vadd.f32 %v1244, %v1247
        %vm1249 = vweird.f32 %v1228
        %vm1250 = vweird.f32 %v1244
        %vm1251 = vmor %vm1249, %vm1250
        %v1252 = vsel %vm1251, %v1244, %v1248
        %v1253 = vand.u32 2147483647, %v1228
        %vm1254 = vcmp.eq.f32.partialorder %v1253, 8.507059e+37
        %v1255 = vand.u32 %v1228, 2147483648
        %v1256 = vor.u32 1.1754944e-38, %v1255
        %v1257 = vsel %vm1254, %v1256, %v1252
        %v1258 = vmul.f32 1.0, %v1257
        %v1259 = vld [vmem:[%s13] sm:$0xff]
        %v1260 = vld [vmem:[%s13 + $0x8] sm:$0xff]
        %v1261 = vld [vmem:[%s14] sm:$0xff]
        %v1262 = vld [vmem:[%s14 + $0x8] sm:$0xff]
        %1264 = vset.pattern.permute.xlu0 0
        %1265 = vperm.xlu0 %1264, %v1261
        %v1266 = vpop.permute.xlu0 %1265
        %1269 = vset.pattern.permute.xlu0 0
        %1270 = vperm.xlu0 %1269, %v1262
        %v1271 = vpop.permute.xlu0 %1270
        %1274 = vrot.lane.b32.xlu0 %v1176, 112
        %v1275 = vpop.permute.xlu0 %1274
        %v1278 = vsel %vm1191, %v1259, 0
        %v1281 = vsel %vm1191, %v1260, 0
        %1283 = vmatpush.msra.mxu0 0.0
        %1284 = vmatpush.msra.mxu0 0.0
        %1285 = vmatpush.msra.mxu0 0.0
        %1286 = vmatpush.msra.mxu0 0.0
        %1287 = vmatpush.msra.mxu0 0.0
        %1288 = vmatpush.msra.mxu0 0.0
        %1289 = vmatpush.msra.mxu0 0.0
        %1290 = vmatpush.msra.mxu0 0.0
        %1291 = vmatpush.msra.mxu0 0.0
        %1292 = vmatpush.msra.mxu0 0.0
        %1293 = vmatpush.msra.mxu0 0.0
        %1294 = vmatpush.msra.mxu0 0.0
        %1295 = vmatpush.msra.mxu0 0.0
        %1296 = vmatpush.msra.mxu0 0.0
        %1297 = vmatpush.msra.mxu0 0.0
        %1298 = vmatpush.msra.mxu0 %v1275
        %1299 = vmatmul.f32.gmra.mxu0 %v1278
        %v1300 = vpop.f32.mrf.mxu0
        %v1301 = vadd.f32 %v1266, %v1300
        %1302 = vmatmul.f32.gmra.mxu0 %v1281
        %v1303 = vpop.f32.mrf.mxu0
        %v1304 = vadd.f32 %v1271, %v1303
        %1305 = vdwg.mxu0
        %v1306 = vxor.u32 %v1301, 2147483648
        %v1307 = vxor.u32 %v1304, 2147483648
        %v1308 = vmul.f32 %v1306, 1.442695
        %v1309 = vpow.pop %v1308
        %v1310 = vmul.f32 %v1307, 1.442695
        %v1311 = vpow.pop %v1310
        %v1312 = vadd.f32 %v1309, 1.0
        %v1313 = vadd.f32 %v1311, 1.0
        %v1314 = vrcp.pop %v1312
        %v1315 = vmul.f32 %v1312, %v1314
        %v1316 = vsub.f32 1.0, %v1315
        %v1317 = vmul.f32 %v1314, %v1316
        %v1318 = vadd.f32 %v1314, %v1317
        %vm1319 = vweird.f32 %v1312
        %vm1320 = vweird.f32 %v1314
        %vm1321 = vmor %vm1319, %vm1320
        %v1322 = vsel %vm1321, %v1314, %v1318
        %v1323 = vand.u32 2147483647, %v1312
        %vm1324 = vcmp.eq.f32.partialorder %v1323, 8.507059e+37
        %v1325 = vand.u32 %v1312, 2147483648
        %v1326 = vor.u32 1.1754944e-38, %v1325
        %v1327 = vsel %vm1324, %v1326, %v1322
        %v1328 = vmul.f32 1.0, %v1327
        %v1329 = vrcp.pop %v1313
        %v1330 = vmul.f32 %v1313, %v1329
        %v1331 = vsub.f32 1.0, %v1330
        %v1332 = vmul.f32 %v1329, %v1331
        %v1333 = vadd.f32 %v1329, %v1332
        %vm1334 = vweird.f32 %v1313
        %vm1335 = vweird.f32 %v1329
        %vm1336 = vmor %vm1334, %vm1335
        %v1337 = vsel %vm1336, %v1329, %v1333
        %v1338 = vand.u32 2147483647, %v1313
        %vm1339 = vcmp.eq.f32.partialorder %v1338, 8.507059e+37
        %v1340 = vand.u32 %v1313, 2147483648
        %v1341 = vor.u32 1.1754944e-38, %v1340
        %v1342 = vsel %vm1339, %v1341, %v1337
        %v1343 = vmul.f32 1.0, %v1342
        %v1344 = vld [vmem:[%s15] sm:$0xff]
        %v1345 = vld [vmem:[%s15 + $0x8] sm:$0xff]
        %v1346 = vld [vmem:[%s15 + $0x10] sm:$0xff]
        %v1347 = vld [vmem:[%s15 + $0x18] sm:$0xff]
        %v1349 = vsel %vm552, %v1243, 0
        %v1352 = vsel %vm552, %v1258, 0
        %1354 = vmatpush.msra.mxu0 0.0
        %1355 = vmatpush.msra.mxu0 0.0
        %1356 = vmatpush.msra.mxu0 0.0
        %1357 = vmatpush.msra.mxu0 0.0
        %1358 = vmatpush.msra.mxu0 0.0
        %1359 = vmatpush.msra.mxu0 0.0
        %1360 = vmatpush.msra.mxu0 0.0
        %1361 = vmatpush.msra.mxu0 0.0
        %1362 = vmatpush.msra.mxu0 0.0
        %1363 = vmatpush.msra.mxu0 0.0
        %1364 = vmatpush.msra.mxu0 0.0
        %1365 = vmatpush.msra.mxu0 0.0
        %1366 = vmatpush.msra.mxu0 0.0
        %1367 = vmatpush.msra.mxu0 0.0
        %1368 = vmatpush.msra.mxu0 %v1346
        %1369 = vmatpush.msra.mxu0 %v1344
        %1370 = vmatmul.f32.gmra.mxu0 %v1349
        %v1371 = vpop.f32.mrf.mxu0
        %v1372 = vadd.f32 0.0, %v1371
        %1373 = vmatmul.f32.gmra.mxu0 %v1352
        %v1374 = vpop.f32.mrf.mxu0
        %v1375 = vadd.f32 0.0, %v1374
        %1376 = vdwg.mxu0
        %1377 = vmatpush.msra.mxu0 0.0
        %1378 = vmatpush.msra.mxu0 0.0
        %1379 = vmatpush.msra.mxu0 0.0
        %1380 = vmatpush.msra.mxu0 0.0
        %1381 = vmatpush.msra.mxu0 0.0
        %1382 = vmatpush.msra.mxu0 0.0
        %1383 = vmatpush.msra.mxu0 0.0
        %1384 = vmatpush.msra.mxu0 0.0
        %1385 = vmatpush.msra.mxu0 0.0
        %1386 = vmatpush.msra.mxu0 0.0
        %1387 = vmatpush.msra.mxu0 0.0
        %1388 = vmatpush.msra.mxu0 0.0
        %1389 = vmatpush.msra.mxu0 0.0
        %1390 = vmatpush.msra.mxu0 0.0
        %1391 = vmatpush.msra.mxu0 %v1347
        %1392 = vmatpush.msra.mxu0 %v1345
        %1393 = vmatmul.f32.gmra.mxu0 %v1349
        %v1394 = vpop.f32.mrf.mxu0
        %v1395 = vadd.f32 0.0, %v1394
        %1396 = vmatmul.f32.gmra.mxu0 %v1352
        %v1397 = vpop.f32.mrf.mxu0
        %v1398 = vadd.f32 0.0, %v1397
        %1399 = vdwg.mxu0
        %v1400 = vld [vmem:[%s16] sm:$0xff]
        %v1401 = vld [vmem:[%s16 + $0x8] sm:$0xff]
        %v1402 = vld [vmem:[%s16 + $0x10] sm:$0xff]
        %v1403 = vld [vmem:[%s16 + $0x18] sm:$0xff]
        %v1405 = vsel %vm552, %v1328, 0
        %v1408 = vsel %vm552, %v1343, 0
        %1410 = vmatpush.msra.mxu0 0.0
        %1411 = vmatpush.msra.mxu0 0.0
        %1412 = vmatpush.msra.mxu0 0.0
        %1413 = vmatpush.msra.mxu0 0.0
        %1414 = vmatpush.msra.mxu0 0.0
        %1415 = vmatpush.msra.mxu0 0.0
        %1416 = vmatpush.msra.mxu0 0.0
        %1417 = vmatpush.msra.mxu0 0.0
        %1418 = vmatpush.msra.mxu0 0.0
        %1419 = vmatpush.msra.mxu0 0.0
        %1420 = vmatpush.msra.mxu0 0.0
        %1421 = vmatpush.msra.mxu0 0.0
        %1422 = vmatpush.msra.mxu0 0.0
        %1423 = vmatpush.msra.mxu0 0.0
        %1424 = vmatpush.msra.mxu0 %v1402
        %1425 = vmatpush.msra.mxu0 %v1400
        %1426 = vmatmul.f32.gmra.mxu0 %v1405
        %v1427 = vpop.f32.mrf.mxu0
        %v1428 = vadd.f32 0.0, %v1427
        %1429 = vmatmul.f32.gmra.mxu0 %v1408
        %v1430 = vpop.f32.mrf.mxu0
        %v1431 = vadd.f32 0.0, %v1430
        %1432 = vdwg.mxu0
        %1433 = vmatpush.msra.mxu0 0.0
        %1434 = vmatpush.msra.mxu0 0.0
        %1435 = vmatpush.msra.mxu0 0.0
        %1436 = vmatpush.msra.mxu0 0.0
        %1437 = vmatpush.msra.mxu0 0.0
        %1438 = vmatpush.msra.mxu0 0.0
        %1439 = vmatpush.msra.mxu0 0.0
        %1440 = vmatpush.msra.mxu0 0.0
        %1441 = vmatpush.msra.mxu0 0.0
        %1442 = vmatpush.msra.mxu0 0.0
        %1443 = vmatpush.msra.mxu0 0.0
        %1444 = vmatpush.msra.mxu0 0.0
        %1445 = vmatpush.msra.mxu0 0.0
        %1446 = vmatpush.msra.mxu0 0.0
        %1447 = vmatpush.msra.mxu0 %v1403
        %1448 = vmatpush.msra.mxu0 %v1401
        %1449 = vmatmul.f32.gmra.mxu0 %v1405
        %v1450 = vpop.f32.mrf.mxu0
        %v1451 = vadd.f32 0.0, %v1450
        %1452 = vmatmul.f32.gmra.mxu0 %v1408
        %v1453 = vpop.f32.mrf.mxu0
        %v1454 = vadd.f32 0.0, %v1453
        %1455 = vdwg.mxu0
        %v1456 = vmul.f32 %v1037, %v1372
        %v1457 = vmul.f32 %v1038, %v1395
        %v1458 = vmul.f32 %v1039, %v1375
        %v1459 = vmul.f32 %v1040, %v1398
        %v1460 = vmul.f32 %v1456, %v1428
        %v1461 = vmul.f32 %v1457, %v1451
        %v1462 = vmul.f32 %v1458, %v1431
        %v1463 = vmul.f32 %v1459, %v1454
        %v1464 = vadd.f32 %v1460, %v547
        %v1465 = vadd.f32 %v1461, %v548
        %v1466 = vadd.f32 %v1462, %v549
        %v1467 = vadd.f32 %v1463, %v550
        %1468 = vst [vmem:[%s541] sm:$0xff] %v1464
        %1469 = vst [vmem:[%s541 + $0x8] sm:$0xff] %v1465
        %1470 = vst [vmem:[%s541 + $0x10] sm:$0xff] %v1466
        %1471 = vst [vmem:[%s541 + $0x18] sm:$0xff] %v1467
        %s1472 = sand.u32 %s401, 1
        %s1473 = scalar_lea.sflag [#allocation3], %s1472
        %s1474 = sand.u32 %s401, 1
        %s1475 = smul.addr %s1474, 32
        %s1476 = scalar_lea.vmem [#allocation2], %s1475
        // Predicated region
        $region89: #{tpu_custom_call.1} parent=87 // pred_check
          %p1477 = pneg %p411
        $region90: #{tpu_custom_call.1} parent=87 // pred_check_branch
          %1479 = sbr.rel (%p1477) target = $region92
        $region91: #{tpu_custom_call.1} parent=87 // pred_region
          %1481 = vsyncadd %s1473, 0
          %s1482 = smul.addr %s31, 4
          %s1483 = smul.addr %s1482, 8
          %s1484 = scalar_lea.hbm %s17, %s1483
          %s1485 = sshll.u32 %s1476, 4
          %s1486 = int_to_ptr.vmem [resolvable:$true] %s1485
          %s1487 = sshll.u32 %s1484, 4
          %s1488 = int_to_ptr.hbm [resolvable:$true] %s1487
          %1493 = dma.vmem_to_hbm [thread:$0]  %s1486, 512, %s1488, %s1473, 256, 256, 16
        $region92: #{tpu_custom_call.1} parent=87 // pred_fallthru
          _
      $region88: #{tpu_custom_call.1} parent=5 // pred_fallthru
        _
      %p1494 = scmp.le.s32.totalorder 2, %s26
      // Predicated region
      $region93: #{tpu_custom_call.1} parent=5 // pred_check
        %p1495 = pneg %p1494
      $region94: #{tpu_custom_call.1} parent=5 // pred_check_branch
        %1497 = sbr.rel (%p1495) target = $region96
      $region95: #{tpu_custom_call.1} parent=5 // pred_region
        %s1498 = ssub.s32 %s26, 2
        // Predicated region
        $region97: #{tpu_custom_call.1} parent=95 // pred_check
          %p1499 = pneg %p417
        $region98: #{tpu_custom_call.1} parent=95 // pred_check_branch
          %1501 = sbr.rel (%p1499) target = $region100
        $region99: #{tpu_custom_call.1} parent=95 // pred_region
          %s1502 = sand.u32 %s402, 1
          %s1503 = scalar_lea.sflag [#allocation3], %s1502
          %s1504 = sand.u32 %s402, 1
          %s1505 = smul.addr %s1504, 32
          %s1506 = scalar_lea.vmem [#allocation2], %s1505
          %1508 = dma.done %s1503, 512
        $region100: #{tpu_custom_call.1} parent=95 // pred_fallthru
          _
      $region96: #{tpu_custom_call.1} parent=5 // pred_fallthru
        _
    $region6: #{tpu_custom_call.1} parent=1 // loop_footer
      %s30 = sadd.s32 1, %s26
    $region7: #{tpu_custom_call.1} parent=1 // loop_footer_branch
      %25 = sbr.rel target = $region3
    $region8: #{tpu_custom_call.1} parent=1 // loop_exit
      _
    %1509 = vsyncpa [#allocation3], 1
    %s1510 = scalar_lea.sflag [#allocation3], 1
    %1511 = vsyncpa %s1510, 1

</llo_original>
